<compile_context>
chip_gen: v6e
topology: v6e:2x2x1
jax: 0.10.0
libtpu: 0.0.40
codegen_flags: <defaults>
</compile_context>

<pallas_src>
import jax
import jax.numpy as jnp
from jax import lax
from jax.experimental import pallas as pl
from jax.experimental.pallas import tpu as pltpu

# ---- config mirroring Prompt2Img.__init__ (small shapes for the demo) ----
NUM_DIFFUSION_STEPS = 50
GUIDANCE_SCALE = 5.0
MAX_NUM_WORDS = 77          # max_num_workds in the module
ATTN_VALUE_MIN = -0.5
ATTN_VALUE_MAX = 0.5
CLIP_LEN = 4                # frames ( = len(prompts) )

LATENT_C = 4                # LDM latent channels
LATENT_HW = 8               # small latent spatial (stand-in for IMG_SIZE // 8)
NUM_HEADS = 4
HEAD_DIM = 32
MODEL_DIM = NUM_HEADS * HEAD_DIM      # 128
NQ = LATENT_HW * LATENT_HW            # 64 spatial queries per frame
NK = MAX_NUM_WORDS                    # 77 text keys
FNQ = CLIP_LEN * NQ                   # 256 = lane-dense batched column dimension
DT = 1.0 / NUM_DIFFUSION_STEPS
SCALE = 1.0 / float(HEAD_DIM) ** 0.5


# --------------------------------------------------------------------------
# Fused kernel: 50-step diffusion loop with prompt-to-prompt re-weighted
# cross-attention and classifier-free guidance (pre-folded), VMEM-resident.
#
#   x0  : (C, FNQ)      latent features, transposed / lane-dense (columns = frame-major)
#   m   : (H, NK, C)    per-head folded score matrices  M_h^T = (w_q_h @ K_h^T * scale)^T
#   vo  : (H, C, NK)    per-head folded value+out proj  VO_h^T = (V_h @ w_o_h)^T
#   eq  : (NK, FNQ)     CFG-folded equalizer 1 + g*(equalizer - 1), broadcast per column
#   out : (C, FNQ)      final latent features after 50 steps
# --------------------------------------------------------------------------
def _fused_diffusion_kernel(x0_ref, m_ref, vo_ref, eq_ref, xout_ref):
    def step(_, x):                                           # x: (C, FNQ) carried in vregs
        eqv = eq_ref[...]                                     # (NK, FNQ), loop-invariant
        eps = jnp.zeros((LATENT_C, FNQ), jnp.float32)
        for h in range(NUM_HEADS):                            # statically unrolled (4 heads)
            # scores^T: (NK, C) @ (C, FNQ) -> (NK, FNQ); scale already folded into m
            s = jnp.dot(m_ref[h], x, preferred_element_type=jnp.float32)
            s = s - jnp.max(s, axis=0, keepdims=True)
            p = jnp.exp(s)
            denom = jnp.sum(p, axis=0, keepdims=True)         # >= 1, safe for approx
            p = p * pl.reciprocal(denom, approx=True)         # EUP slot, not VPU divide
            # AttentionReweight * CFG combine (folded) + value/out projection:
            #   (C, NK) @ (NK, FNQ) -> (C, FNQ)
            eps = eps + jnp.dot(vo_ref[h], p * eqv,
                                preferred_element_type=jnp.float32)
        return x - DT * eps                                   # latent update (epilogue)

    xout_ref[...] = lax.fori_loop(0, NUM_DIFFUSION_STEPS, step, x0_ref[...])


def fused_prompt2img_diffusion(x0, m, vo, eq_t):
    return pl.pallas_call(
        _fused_diffusion_kernel,
        out_shape=jax.ShapeDtypeStruct((LATENT_C, FNQ), jnp.float32),
        grid=(1,),
        in_specs=[
            pl.BlockSpec((LATENT_C, FNQ), lambda i: (0, 0)),
            pl.BlockSpec((NUM_HEADS, NK, LATENT_C), lambda i: (0, 0, 0)),
            pl.BlockSpec((NUM_HEADS, LATENT_C, NK), lambda i: (0, 0, 0)),
            pl.BlockSpec((NK, FNQ), lambda i: (0, 0)),
        ],
        out_specs=pl.BlockSpec((LATENT_C, FNQ), lambda i: (0, 0)),
        compiler_params=pltpu.CompilerParams(
            dimension_semantics=("arbitrary",)),
    )(x0, m, vo, eq_t)


# --------------------------------------------------------------------------
# Forward pass (one-time XLA prep + single fused Pallas kernel)
# --------------------------------------------------------------------------
@jax.jit
def prompt2img_forward(latents, ctx, eq, w_q, w_k, w_v, w_o):
    F = latents.shape[0]

    # one-time text-encoder surrogate projections -> per-head keys / values
    kk = (ctx @ w_k).reshape(NK, NUM_HEADS, HEAD_DIM)        # (NK, H, Dh)
    vv = (ctx @ w_v).reshape(NK, NUM_HEADS, HEAD_DIM)        # (NK, H, Dh)
    wq_h = w_q.reshape(LATENT_C, NUM_HEADS, HEAD_DIM)        # (C, H, Dh)
    wo_h = w_o.reshape(NUM_HEADS, HEAD_DIM, LATENT_C)        # (H, Dh, C)

    # step-invariant folds (done once, outside the 50-step loop):
    #   M_h^T[k, c]  = sum_d w_q[c, h*Dh+d] * K[k, h*Dh+d] * scale
    m = jnp.einsum('chd,khd->hkc', wq_h, kk) * SCALE         # (H, NK, C)
    #   VO_h^T[c, k] = sum_d V[k, h*Dh+d] * w_o[h*Dh+d, c]
    vo = jnp.einsum('khd,hdc->hck', vv, wo_h)                # (H, C, NK)

    # classifier-free-guidance fold: eps_u + g*(eps_t - eps_u) == (p*(1+g*(eq-1))) @ VO
    eq_eff = 1.0 + GUIDANCE_SCALE * (eq - 1.0)               # (F, NK)
    eq_t = jnp.repeat(eq_eff, NQ, axis=0).T                  # (NK, F*NQ), lane-dense cols

    # latent NCHW -> lane-dense (C, F*NQ) feature columns (layout-only change)
    x0 = latents.reshape(F, LATENT_C, NQ).transpose(1, 0, 2).reshape(LATENT_C, F * NQ)

    # the entire 50-step diffusion loop runs inside this single kernel
    x_final = fused_prompt2img_diffusion(x0, m, vo, eq_t)    # (C, F*NQ)

    latents_out = x_final.reshape(LATENT_C, F, NQ).transpose(1, 0, 2).reshape(
        F, LATENT_C, LATENT_HW, LATENT_HW)

    # TODO(synk): the pretrained VQ-VAE image decoder is not reproducible in-script;
    #             return a normalized uint8 view of the final latent as "images".
    imgs = jnp.clip(latents_out / 2.0 + 0.5, 0.0, 1.0)
    return (imgs * 255.0).astype(jnp.uint8)


if __name__ == "__main__":
    key = jax.random.PRNGKey(0)
    k_lat, k_ctx, k_wq, k_wk, k_wv, k_wo = jax.random.split(key, 6)

    # get_baseline_latent_init: one gaussian latent expanded over the clip
    latent = jax.random.normal(k_lat, (1, LATENT_C, LATENT_HW, LATENT_HW), jnp.float32)
    latents = jnp.broadcast_to(latent, (CLIP_LEN, LATENT_C, LATENT_HW, LATENT_HW))

    # deterministic surrogates for pretrained text-encoder output and projections
    # TODO(synk): the real q/k/v/o weights come from the pretrained LDM UNet attention blocks.
    ctx = jax.random.normal(k_ctx, (MAX_NUM_WORDS, MODEL_DIM), jnp.float32) * 0.02
    w_q = jax.random.normal(k_wq, (LATENT_C, MODEL_DIM), jnp.float32) * 0.02
    w_k = jax.random.normal(k_wk, (MODEL_DIM, MODEL_DIM), jnp.float32) * 0.02
    w_v = jax.random.normal(k_wv, (MODEL_DIM, MODEL_DIM), jnp.float32) * 0.02
    w_o = jax.random.normal(k_wo, (MODEL_DIM, LATENT_C), jnp.float32) * 0.02

    # get_equalizer + AttentionReweight semantics:
    #   frame 0 keeps the base attention; frames 1..clip_len-1 scale the
    #   descriptor token positions by linspace(attn_min, attn_max, clip_len-1).
    attn_values = jnp.linspace(ATTN_VALUE_MIN, ATTN_VALUE_MAX, CLIP_LEN - 1)
    descriptor_token_positions = (3,)   # deterministic stand-in for tokenizer word_select
    eq = jnp.ones((CLIP_LEN, MAX_NUM_WORDS), jnp.float32)
    for pos in descriptor_token_positions:
        eq = eq.at[1:, pos].set(attn_values)

    images = prompt2img_forward(latents, ctx, eq, w_q, w_k, w_v, w_o)
    jax.block_until_ready(images)
    assert images.shape == (CLIP_LEN, LATENT_C, LATENT_HW, LATENT_HW)
    print("KERNEL_OK")
</pallas_src>

<mosaic_0001>
module attributes {stable_mosaic.version = 11 : i64} {
  func.func @_fused_diffusion_kernel(%arg0: i32, %arg1: memref<4x256xf32, #tpu.memory_space<vmem>>, %arg2: memref<4x77x4xf32, #tpu.memory_space<vmem>>, %arg3: memref<4x4x77xf32, #tpu.memory_space<vmem>>, %arg4: memref<77x256xf32, #tpu.memory_space<vmem>>, %arg5: memref<4x256xf32, #tpu.memory_space<vmem>>) attributes {dimension_semantics = [#tpu.dimension_semantics<arbitrary>], iteration_bounds = array<i64: 1>, scalar_prefetch = 0 : i64, scratch_operands = 0 : i64, tpu.core_type = #tpu.core_type<tc>, window_params = [{pipeline_mode = #tpu.pipeline_mode<synchronous>, transform_indices = @transform_0, window_bounds = array<i64: 4, 256>}, {pipeline_mode = #tpu.pipeline_mode<synchronous>, transform_indices = @transform_1, window_bounds = array<i64: 4, 77, 4>}, {pipeline_mode = #tpu.pipeline_mode<synchronous>, transform_indices = @transform_2, window_bounds = array<i64: 4, 4, 77>}, {pipeline_mode = #tpu.pipeline_mode<synchronous>, transform_indices = @transform_3, window_bounds = array<i64: 77, 256>}, {pipeline_mode = #tpu.pipeline_mode<synchronous>, transform_indices = @transform_4, window_bounds = array<i64: 4, 256>}]} {
    %c0 = arith.constant 0 : index
    %c0_0 = arith.constant 0 : index
    %0 = vector.load %arg1[%c0, %c0_0] : memref<4x256xf32, #tpu.memory_space<vmem>>, vector<4x256xf32>
    %c0_i32 = arith.constant 0 : i32
    %c50_i32 = arith.constant 50 : i32
    %1 = arith.addi %c0_i32, %c50_i32 : i32
    %c1_i32 = arith.constant 1 : i32
    %2 = scf.for %arg6 = %c0_i32 to %1 step %c1_i32 iter_args(%arg7 = %0) -> (vector<4x256xf32>)  : i32 {
      %c0_3 = arith.constant 0 : index
      %c0_4 = arith.constant 0 : index
      %4 = vector.load %arg4[%c0_3, %c0_4] : memref<77x256xf32, #tpu.memory_space<vmem>>, vector<77x256xf32>
      %cst = arith.constant 0.000000e+00 : f32
      %5 = vector.broadcast %cst : f32 to vector<4x256xf32>
      %c0_5 = arith.constant 0 : index
      %c0_6 = arith.constant 0 : index
      %c0_7 = arith.constant 0 : index
      %6 = vector.load %arg2[%c0_5, %c0_6, %c0_7] : memref<4x77x4xf32, #tpu.memory_space<vmem>>, vector<1x77x4xf32>
      %7 = vector.shape_cast %6 : vector<1x77x4xf32> to vector<77x4xf32>
      %cst_8 = arith.constant dense<0.000000e+00> : vector<77x256xf32>
      %8 = tpu.matmul %7, %arg7, %cst_8 {dimension_numbers = #tpu.dot_dimension_numbers<[1], [0], [0], [1], [0, 0, 1, 1], [], []>} : vector<77x4xf32>, vector<4x256xf32>, vector<77x256xf32> -> vector<77x256xf32>
      %cst_9 = arith.constant dense<0xFF800000> : vector<256xf32>
      %9 = vector.multi_reduction <maximumf>, %8, %cst_9 [0] : vector<77x256xf32> to vector<256xf32>
      %10 = vector.shape_cast %9 : vector<256xf32> to vector<1x256xf32>
      %11 = vector.broadcast %10 : vector<1x256xf32> to vector<77x256xf32>
      %12 = arith.subf %8, %11 : vector<77x256xf32>
      %13 = math.exp %12 : vector<77x256xf32>
      %cst_10 = arith.constant dense<0.000000e+00> : vector<256xf32>
      %14 = vector.multi_reduction <add>, %13, %cst_10 [0] : vector<77x256xf32> to vector<256xf32>
      %15 = vector.shape_cast %14 : vector<256xf32> to vector<1x256xf32>
      %16 = tpu.reciprocal %15 {approx = true} : vector<1x256xf32> -> vector<1x256xf32>
      %17 = vector.broadcast %16 : vector<1x256xf32> to vector<77x256xf32>
      %18 = arith.mulf %13, %17 : vector<77x256xf32>
      %c0_11 = arith.constant 0 : index
      %c0_12 = arith.constant 0 : index
      %c0_13 = arith.constant 0 : index
      %19 = vector.load %arg3[%c0_11, %c0_12, %c0_13] : memref<4x4x77xf32, #tpu.memory_space<vmem>>, vector<1x4x77xf32>
      %20 = vector.shape_cast %19 : vector<1x4x77xf32> to vector<4x77xf32>
      %21 = arith.mulf %18, %4 : vector<77x256xf32>
      %cst_14 = arith.constant dense<0.000000e+00> : vector<4x256xf32>
      %22 = tpu.matmul %20, %21, %cst_14 {dimension_numbers = #tpu.dot_dimension_numbers<[1], [0], [0], [1], [0, 0, 1, 1], [], []>} : vector<4x77xf32>, vector<77x256xf32>, vector<4x256xf32> -> vector<4x256xf32>
      %23 = arith.addf %5, %22 : vector<4x256xf32>
      %c1 = arith.constant 1 : index
      %c0_15 = arith.constant 0 : index
      %c0_16 = arith.constant 0 : index
      %24 = vector.load %arg2[%c1, %c0_15, %c0_16] : memref<4x77x4xf32, #tpu.memory_space<vmem>>, vector<1x77x4xf32>
      %25 = vector.shape_cast %24 : vector<1x77x4xf32> to vector<77x4xf32>
      %cst_17 = arith.constant dense<0.000000e+00> : vector<77x256xf32>
      %26 = tpu.matmul %25, %arg7, %cst_17 {dimension_numbers = #tpu.dot_dimension_numbers<[1], [0], [0], [1], [0, 0, 1, 1], [], []>} : vector<77x4xf32>, vector<4x256xf32>, vector<77x256xf32> -> vector<77x256xf32>
      %cst_18 = arith.constant dense<0xFF800000> : vector<256xf32>
      %27 = vector.multi_reduction <maximumf>, %26, %cst_18 [0] : vector<77x256xf32> to vector<256xf32>
      %28 = vector.shape_cast %27 : vector<256xf32> to vector<1x256xf32>
      %29 = vector.broadcast %28 : vector<1x256xf32> to vector<77x256xf32>
      %30 = arith.subf %26, %29 : vector<77x256xf32>
      %31 = math.exp %30 : vector<77x256xf32>
      %cst_19 = arith.constant dense<0.000000e+00> : vector<256xf32>
      %32 = vector.multi_reduction <add>, %31, %cst_19 [0] : vector<77x256xf32> to vector<256xf32>
      %33 = vector.shape_cast %32 : vector<256xf32> to vector<1x256xf32>
      %34 = tpu.reciprocal %33 {approx = true} : vector<1x256xf32> -> vector<1x256xf32>
      %35 = vector.broadcast %34 : vector<1x256xf32> to vector<77x256xf32>
      %36 = arith.mulf %31, %35 : vector<77x256xf32>
      %c1_20 = arith.constant 1 : index
      %c0_21 = arith.constant 0 : index
      %c0_22 = arith.constant 0 : index
      %37 = vector.load %arg3[%c1_20, %c0_21, %c0_22] : memref<4x4x77xf32, #tpu.memory_space<vmem>>, vector<1x4x77xf32>
      %38 = vector.shape_cast %37 : vector<1x4x77xf32> to vector<4x77xf32>
      %39 = arith.mulf %36, %4 : vector<77x256xf32>
      %cst_23 = arith.constant dense<0.000000e+00> : vector<4x256xf32>
      %40 = tpu.matmul %38, %39, %cst_23 {dimension_numbers = #tpu.dot_dimension_numbers<[1], [0], [0], [1], [0, 0, 1, 1], [], []>} : vector<4x77xf32>, vector<77x256xf32>, vector<4x256xf32> -> vector<4x256xf32>
      %41 = arith.addf %23, %40 : vector<4x256xf32>
      %c2 = arith.constant 2 : index
      %c0_24 = arith.constant 0 : index
      %c0_25 = arith.constant 0 : index
      %42 = vector.load %arg2[%c2, %c0_24, %c0_25] : memref<4x77x4xf32, #tpu.memory_space<vmem>>, vector<1x77x4xf32>
      %43 = vector.shape_cast %42 : vector<1x77x4xf32> to vector<77x4xf32>
      %cst_26 = arith.constant dense<0.000000e+00> : vector<77x256xf32>
      %44 = tpu.matmul %43, %arg7, %cst_26 {dimension_numbers = #tpu.dot_dimension_numbers<[1], [0], [0], [1], [0, 0, 1, 1], [], []>} : vector<77x4xf32>, vector<4x256xf32>, vector<77x256xf32> -> vector<77x256xf32>
      %cst_27 = arith.constant dense<0xFF800000> : vector<256xf32>
      %45 = vector.multi_reduction <maximumf>, %44, %cst_27 [0] : vector<77x256xf32> to vector<256xf32>
      %46 = vector.shape_cast %45 : vector<256xf32> to vector<1x256xf32>
      %47 = vector.broadcast %46 : vector<1x256xf32> to vector<77x256xf32>
      %48 = arith.subf %44, %47 : vector<77x256xf32>
      %49 = math.exp %48 : vector<77x256xf32>
      %cst_28 = arith.constant dense<0.000000e+00> : vector<256xf32>
      %50 = vector.multi_reduction <add>, %49, %cst_28 [0] : vector<77x256xf32> to vector<256xf32>
      %51 = vector.shape_cast %50 : vector<256xf32> to vector<1x256xf32>
      %52 = tpu.reciprocal %51 {approx = true} : vector<1x256xf32> -> vector<1x256xf32>
      %53 = vector.broadcast %52 : vector<1x256xf32> to vector<77x256xf32>
      %54 = arith.mulf %49, %53 : vector<77x256xf32>
      %c2_29 = arith.constant 2 : index
      %c0_30 = arith.constant 0 : index
      %c0_31 = arith.constant 0 : index
      %55 = vector.load %arg3[%c2_29, %c0_30, %c0_31] : memref<4x4x77xf32, #tpu.memory_space<vmem>>, vector<1x4x77xf32>
      %56 = vector.shape_cast %55 : vector<1x4x77xf32> to vector<4x77xf32>
      %57 = arith.mulf %54, %4 : vector<77x256xf32>
      %cst_32 = arith.constant dense<0.000000e+00> : vector<4x256xf32>
      %58 = tpu.matmul %56, %57, %cst_32 {dimension_numbers = #tpu.dot_dimension_numbers<[1], [0], [0], [1], [0, 0, 1, 1], [], []>} : vector<4x77xf32>, vector<77x256xf32>, vector<4x256xf32> -> vector<4x256xf32>
      %59 = arith.addf %41, %58 : vector<4x256xf32>
      %c3 = arith.constant 3 : index
      %c0_33 = arith.constant 0 : index
      %c0_34 = arith.constant 0 : index
      %60 = vector.load %arg2[%c3, %c0_33, %c0_34] : memref<4x77x4xf32, #tpu.memory_space<vmem>>, vector<1x77x4xf32>
      %61 = vector.shape_cast %60 : vector<1x77x4xf32> to vector<77x4xf32>
      %cst_35 = arith.constant dense<0.000000e+00> : vector<77x256xf32>
      %62 = tpu.matmul %61, %arg7, %cst_35 {dimension_numbers = #tpu.dot_dimension_numbers<[1], [0], [0], [1], [0, 0, 1, 1], [], []>} : vector<77x4xf32>, vector<4x256xf32>, vector<77x256xf32> -> vector<77x256xf32>
      %cst_36 = arith.constant dense<0xFF800000> : vector<256xf32>
      %63 = vector.multi_reduction <maximumf>, %62, %cst_36 [0] : vector<77x256xf32> to vector<256xf32>
      %64 = vector.shape_cast %63 : vector<256xf32> to vector<1x256xf32>
      %65 = vector.broadcast %64 : vector<1x256xf32> to vector<77x256xf32>
      %66 = arith.subf %62, %65 : vector<77x256xf32>
      %67 = math.exp %66 : vector<77x256xf32>
      %cst_37 = arith.constant dense<0.000000e+00> : vector<256xf32>
      %68 = vector.multi_reduction <add>, %67, %cst_37 [0] : vector<77x256xf32> to vector<256xf32>
      %69 = vector.shape_cast %68 : vector<256xf32> to vector<1x256xf32>
      %70 = tpu.reciprocal %69 {approx = true} : vector<1x256xf32> -> vector<1x256xf32>
      %71 = vector.broadcast %70 : vector<1x256xf32> to vector<77x256xf32>
      %72 = arith.mulf %67, %71 : vector<77x256xf32>
      %c3_38 = arith.constant 3 : index
      %c0_39 = arith.constant 0 : index
      %c0_40 = arith.constant 0 : index
      %73 = vector.load %arg3[%c3_38, %c0_39, %c0_40] : memref<4x4x77xf32, #tpu.memory_space<vmem>>, vector<1x4x77xf32>
      %74 = vector.shape_cast %73 : vector<1x4x77xf32> to vector<4x77xf32>
      %75 = arith.mulf %72, %4 : vector<77x256xf32>
      %cst_41 = arith.constant dense<0.000000e+00> : vector<4x256xf32>
      %76 = tpu.matmul %74, %75, %cst_41 {dimension_numbers = #tpu.dot_dimension_numbers<[1], [0], [0], [1], [0, 0, 1, 1], [], []>} : vector<4x77xf32>, vector<77x256xf32>, vector<4x256xf32> -> vector<4x256xf32>
      %77 = arith.addf %59, %76 : vector<4x256xf32>
      %cst_42 = arith.constant 2.000000e-02 : f32
      %78 = vector.broadcast %cst_42 : f32 to vector<4x256xf32>
      %79 = arith.mulf %78, %77 : vector<4x256xf32>
      %80 = arith.subf %arg7, %79 : vector<4x256xf32>
      scf.yield %80 : vector<4x256xf32>
    }
    %c0_1 = arith.constant 0 : index
    %c0_2 = arith.constant 0 : index
    %3 = vector.load %arg5[%c0_1, %c0_2] : memref<4x256xf32, #tpu.memory_space<vmem>>, vector<4x256xf32>
    tpu.vector_store %arg5[%c0_1, %c0_2], %2 {strides = array<i32>} : memref<4x256xf32, #tpu.memory_space<vmem>>, vector<4x256xf32>,
    return
  }
  func.func @transform_0(%arg0: i32) -> (i32, i32) {
    %c0_i32 = arith.constant 0 : i32
    %c0_i32_0 = arith.constant 0 : i32
    %c0_i32_1 = arith.constant 0 : i32
    return %c0_i32, %c0_i32_0 : i32, i32
  }
  func.func @transform_1(%arg0: i32) -> (i32, i32, i32) {
    %c0_i32 = arith.constant 0 : i32
    %c0_i32_0 = arith.constant 0 : i32
    %c0_i32_1 = arith.constant 0 : i32
    %c0_i32_2 = arith.constant 0 : i32
    return %c0_i32, %c0_i32_0, %c0_i32_1 : i32, i32, i32
  }
  func.func @transform_2(%arg0: i32) -> (i32, i32, i32) {
    %c0_i32 = arith.constant 0 : i32
    %c0_i32_0 = arith.constant 0 : i32
    %c0_i32_1 = arith.constant 0 : i32
    %c0_i32_2 = arith.constant 0 : i32
    return %c0_i32, %c0_i32_0, %c0_i32_1 : i32, i32, i32
  }
  func.func @transform_3(%arg0: i32) -> (i32, i32) {
    %c0_i32 = arith.constant 0 : i32
    %c0_i32_0 = arith.constant 0 : i32
    %c0_i32_1 = arith.constant 0 : i32
    return %c0_i32, %c0_i32_0 : i32, i32
  }
  func.func @transform_4(%arg0: i32) -> (i32, i32) {
    %c0_i32 = arith.constant 0 : i32
    %c0_i32_0 = arith.constant 0 : i32
    %c0_i32_1 = arith.constant 0 : i32
    return %c0_i32, %c0_i32_0 : i32, i32
  }
}

</mosaic_0001>

<llo_original>
// kernel: prompt2img_forward.1
$region0: #{prompt2img_forward.1}
  #allocation0 [shape = 'u32[]', space=smem, size = 0x4, offset = 0x4, fixed_abs, tag = 'smem constant byte address 0x4 - core index']
  #allocation1 [shape = 'u32[144,128]{1,0:T(1,128)}', space=vmem, size = 0x12000, scoped, tag = 'internal scratch']
  %s0 = inlined_call_operand.vmem [shape: f32[4,256], index: 0, kind: input, shape index: {}]
  %s1 = inlined_call_operand.vmem [shape: f32[4,77,4], index: 1, kind: input, shape index: {}]
  %s2 = inlined_call_operand.vmem [shape: f32[4,4,77], index: 2, kind: input, shape index: {}]
  %s3 = inlined_call_operand.vmem [shape: f32[77,256], index: 3, kind: input, shape index: {}]
  %s4 = inlined_call_operand.vmem [shape: f32[4,256], index: 4, kind: output, shape index: {}]
  %s5 = sld [smem:[#allocation0]]
  $region33: #{prompt2img_forward.1} parent=0
    _
  %s7 = ssub.s32 1, %s5
  %s8 = scalar_select 0, %s7, %s5
  // Predicated region
  $region2: #{prompt2img_forward.1} parent=0 // pred_check
    _
  $region3: #{prompt2img_forward.1} parent=0 // pred_check_branch
    %10 = sbr.rel (0) target = $region5
  $region4: #{prompt2img_forward.1} parent=0 // pred_region
    _
  $region5: #{prompt2img_forward.1} parent=0 // pred_fallthru
    _
  // Predicated region
  $region6: #{prompt2img_forward.1} parent=0 // pred_check
    _
  $region7: #{prompt2img_forward.1} parent=0 // pred_check_branch
    %12 = sbr.rel (0) target = $region9
  $region8: #{prompt2img_forward.1} parent=0 // pred_region
    _
  $region9: #{prompt2img_forward.1} parent=0 // pred_fallthru
    _
  // Predicated region
  $region10: #{prompt2img_forward.1} parent=0 // pred_check
    _
  $region11: #{prompt2img_forward.1} parent=0 // pred_check_branch
    %14 = sbr.rel (0) target = $region13
  $region12: #{prompt2img_forward.1} parent=0 // pred_region
    _
  $region13: #{prompt2img_forward.1} parent=0 // pred_fallthru
    _
  // Predicated region
  $region14: #{prompt2img_forward.1} parent=0 // pred_check
    _
  $region15: #{prompt2img_forward.1} parent=0 // pred_check_branch
    %16 = sbr.rel (0) target = $region17
  $region16: #{prompt2img_forward.1} parent=0 // pred_region
    _
  $region17: #{prompt2img_forward.1} parent=0 // pred_fallthru
    _
  %v17 = vld [vmem:[%s0] sm:$0xff]
  loop: start=0, step=1, limit=50
  $region18: #{prompt2img_forward.1} parent=0 // loop_pre_header
    _
  $region19: #{prompt2img_forward.1} parent=0 // loop_header
    %s19 = sphi 0, %s23
    %p20 = scmp.ge.s32.totalorder %s19, 50
    %v24 = vphi %v17, %v1719
  $region20: #{prompt2img_forward.1} parent=0 // loop_header_branch
    %22 = sbr.rel (%p20) target = $region24
  $region21: #{prompt2img_forward.1} parent=0 // loop_body
    %v25 = vld [vmem:[%s3] sm:$0xff]
    %v26 = vld [vmem:[%s3 + $0x8] sm:$0xff]
    %v27 = vld [vmem:[%s3 + $0x10] sm:$0xff]
    %v28 = vld [vmem:[%s3 + $0x18] sm:$0xff]
    %v29 = vld [vmem:[%s3 + $0x20] sm:$0xff]
    %v30 = vld [vmem:[%s3 + $0x28] sm:$0xff]
    %v31 = vld [vmem:[%s3 + $0x30] sm:$0xff]
    %v32 = vld [vmem:[%s3 + $0x38] sm:$0xff]
    %v33 = vld [vmem:[%s3 + $0x40] sm:$0xff]
    %v34 = vld [vmem:[%s3 + $0x48] sm:$0xff]
    %v35 = vld [vmem:[%s3 + $0x50] sm:$0xff]
    %v36 = vld [vmem:[%s3 + $0x58] sm:$0xff]
    %v37 = vld [vmem:[%s3 + $0x60] sm:$0xff]
    %v38 = vld [vmem:[%s3 + $0x68] sm:$0xff]
    %v39 = vld [vmem:[%s3 + $0x70] sm:$0xff]
    %v40 = vld [vmem:[%s3 + $0x78] sm:$0xff]
    %v41 = vld [vmem:[%s3 + $0x80] sm:$0xff]
    %v42 = vld [vmem:[%s3 + $0x88] sm:$0xff]
    %v43 = vld [vmem:[%s3 + $0x90] sm:$0x1f]
    %v44 = vld [vmem:[%s3 + $0x98] sm:$0x1f]
    %v45 = vld [vmem:[%s1] sm:$0xff]
    %v46 = vld [vmem:[%s1 + $0x8] sm:$0xff]
    %v47 = vld [vmem:[%s1 + $0x10] sm:$0xff]
    %v48 = vld [vmem:[%s1 + $0x18] sm:$0xff]
    %v49 = vld [vmem:[%s1 + $0x20] sm:$0xff]
    %v50 = vld [vmem:[%s1 + $0x28] sm:$0xff]
    %v51 = vld [vmem:[%s1 + $0x30] sm:$0xff]
    %v52 = vld [vmem:[%s1 + $0x38] sm:$0xff]
    %v53 = vld [vmem:[%s1 + $0x40] sm:$0xff]
    %v54 = vld [vmem:[%s1 + $0x48] sm:$0x1f]
    %v56 = vcombine.high %v24, %v24
    %vm57 = vcmask 31744
    %v59 = vsel %vm57, %v45, 0
    %v62 = vsel %vm57, %v46, 0
    %v65 = vsel %vm57, %v47, 0
    %v68 = vsel %vm57, %v48, 0
    %v71 = vsel %vm57, %v49, 0
    %v74 = vsel %vm57, %v50, 0
    %v77 = vsel %vm57, %v51, 0
    %v80 = vsel %vm57, %v52, 0
    %v83 = vsel %vm57, %v53, 0
    %v86 = vsel %vm57, %v54, 0
    %vm88 = vcmask 1043456
    %v89 = vsel %vm88, %v24, 0
    %v91 = vsel %vm88, %v56, 0
    %93 = vmatprep.subr.mxu0 0.0
    %94 = vmatpush1.msra.mxu0 0.0
    %95 = vmatprep.subr.mxu0 0.0
    %96 = vmatpush1.msra.mxu0 0.0
    %97 = vmatprep.subr.mxu0 0.0
    %98 = vmatpush1.msra.mxu0 0.0
    %99 = vmatprep.subr.mxu0 0.0
    %100 = vmatpush1.msra.mxu0 0.0
    %101 = vmatprep.subr.mxu0 0.0
    %102 = vmatpush1.msra.mxu0 0.0
    %103 = vmatprep.subr.mxu0 0.0
    %104 = vmatpush1.msra.mxu0 0.0
    %105 = vmatprep.subr.mxu0 0.0
    %106 = vmatpush1.msra.mxu0 0.0
    %107 = vmatprep.subr.mxu0 0.0
    %108 = vmatpush1.msra.mxu0 0.0
    %109 = vmatprep.subr.mxu0 0.0
    %110 = vmatpush1.msra.mxu0 0.0
    %111 = vmatprep.subr.mxu0 0.0
    %112 = vmatpush1.msra.mxu0 0.0
    %113 = vmatprep.subr.mxu0 0.0
    %114 = vmatpush1.msra.mxu0 0.0
    %115 = vmatprep.subr.mxu0 0.0
    %116 = vmatpush1.msra.mxu0 0.0
    %117 = vmatprep.subr.mxu0 0.0
    %118 = vmatpush1.msra.mxu0 0.0
    %119 = vmatprep.subr.mxu0 0.0
    %120 = vmatpush1.msra.mxu0 0.0
    %121 = vmatprep.subr.mxu0 0.0
    %122 = vmatpush1.msra.mxu0 0.0
    %123 = vmatprep.subr.mxu0 %v91
    %124 = vmatpush1.msra.mxu0 %v89
    %125 = vmatprep.subr.mxu0 0.0
    %126 = vmatpush2.msra.mxu0 0.0
    %127 = vmatprep.subr.mxu0 0.0
    %128 = vmatpush2.msra.mxu0 0.0
    %129 = vmatprep.subr.mxu0 0.0
    %130 = vmatpush2.msra.mxu0 0.0
    %131 = vmatprep.subr.mxu0 0.0
    %132 = vmatpush2.msra.mxu0 0.0
    %133 = vmatprep.subr.mxu0 0.0
    %134 = vmatpush2.msra.mxu0 0.0
    %135 = vmatprep.subr.mxu0 0.0
    %136 = vmatpush2.msra.mxu0 0.0
    %137 = vmatprep.subr.mxu0 0.0
    %138 = vmatpush2.msra.mxu0 0.0
    %139 = vmatprep.subr.mxu0 0.0
    %140 = vmatpush2.msra.mxu0 0.0
    %141 = vmatprep.subr.mxu0 0.0
    %142 = vmatpush2.msra.mxu0 0.0
    %143 = vmatprep.subr.mxu0 0.0
    %144 = vmatpush2.msra.mxu0 0.0
    %145 = vmatprep.subr.mxu0 0.0
    %146 = vmatpush2.msra.mxu0 0.0
    %147 = vmatprep.subr.mxu0 0.0
    %148 = vmatpush2.msra.mxu0 0.0
    %149 = vmatprep.subr.mxu0 0.0
    %150 = vmatpush2.msra.mxu0 0.0
    %151 = vmatprep.subr.mxu0 0.0
    %152 = vmatpush2.msra.mxu0 0.0
    %153 = vmatprep.subr.mxu0 0.0
    %154 = vmatpush2.msra.mxu0 0.0
    %155 = vmatprep.subr.mxu0 0.0
    %156 = vmatpush2.msra.mxu0 0.0
    %157 = vmatprep.mubr.f32.mxu0 0.0
    %158 = vmatmul.mubr.f32.gmra.mxu0 %v59
    %v159 = vpop.f32.mrf.mxu0
    %v160 = vadd.f32 0.0, %v159
    %v161 = vpop.f32.mrf.mxu0
    %v162 = vadd.f32 0.0, %v161
    %163 = vmatprep.mubr.f32.mxu0 0.0
    %164 = vmatmul.mubr.f32.gmra.mxu0 %v62
    %v165 = vpop.f32.mrf.mxu0
    %v166 = vadd.f32 0.0, %v165
    %v167 = vpop.f32.mrf.mxu0
    %v168 = vadd.f32 0.0, %v167
    %169 = vmatprep.mubr.f32.mxu0 0.0
    %170 = vmatmul.mubr.f32.gmra.mxu0 %v65
    %v171 = vpop.f32.mrf.mxu0
    %v172 = vadd.f32 0.0, %v171
    %v173 = vpop.f32.mrf.mxu0
    %v174 = vadd.f32 0.0, %v173
    %175 = vmatprep.mubr.f32.mxu0 0.0
    %176 = vmatmul.mubr.f32.gmra.mxu0 %v68
    %v177 = vpop.f32.mrf.mxu0
    %v178 = vadd.f32 0.0, %v177
    %v179 = vpop.f32.mrf.mxu0
    %v180 = vadd.f32 0.0, %v179
    %181 = vmatprep.mubr.f32.mxu0 0.0
    %182 = vmatmul.mubr.f32.gmra.mxu0 %v71
    %v183 = vpop.f32.mrf.mxu0
    %v184 = vadd.f32 0.0, %v183
    %v185 = vpop.f32.mrf.mxu0
    %v186 = vadd.f32 0.0, %v185
    %187 = vmatprep.mubr.f32.mxu0 0.0
    %188 = vmatmul.mubr.f32.gmra.mxu0 %v74
    %v189 = vpop.f32.mrf.mxu0
    %v190 = vadd.f32 0.0, %v189
    %v191 = vpop.f32.mrf.mxu0
    %v192 = vadd.f32 0.0, %v191
    %193 = vmatprep.mubr.f32.mxu0 0.0
    %194 = vmatmul.mubr.f32.gmra.mxu0 %v77
    %v195 = vpop.f32.mrf.mxu0
    %v196 = vadd.f32 0.0, %v195
    %v197 = vpop.f32.mrf.mxu0
    %v198 = vadd.f32 0.0, %v197
    %199 = vmatprep.mubr.f32.mxu0 0.0
    %200 = vmatmul.mubr.f32.gmra.mxu0 %v80
    %v201 = vpop.f32.mrf.mxu0
    %v202 = vadd.f32 0.0, %v201
    %v203 = vpop.f32.mrf.mxu0
    %v204 = vadd.f32 0.0, %v203
    %205 = vmatprep.mubr.f32.mxu0 0.0
    %206 = vmatmul.mubr.f32.gmra.mxu0 %v83
    %v207 = vpop.f32.mrf.mxu0
    %v208 = vadd.f32 0.0, %v207
    %v209 = vpop.f32.mrf.mxu0
    %v210 = vadd.f32 0.0, %v209
    %211 = vmatprep.mubr.f32.mxu0 0.0
    %212 = vmatmul.mubr.f32.gmra.mxu0 %v86
    %v213 = vpop.f32.mrf.mxu0
    %v214 = vadd.f32 0.0, %v213
    %v215 = vpop.f32.mrf.mxu0
    %v216 = vadd.f32 0.0, %v215
    %217 = vdwg.mxu0
    %v218 = vmax.f32 %v160, %v172
    %v219 = vmax.f32 %v166, %v178
    %v220 = vmax.f32 %v218, %v184
    %v221 = vmax.f32 %v219, %v190
    %v222 = vmax.f32 %v220, %v196
    %v223 = vmax.f32 %v221, %v202
    %v224 = vmax.f32 %v222, %v208
    %vm225 = vcmask 1044480
    %v226 = vsel %vm225, %v214, -inf
    %v227 = vmax.f32 %v223, %v226
    %v228 = vmax.f32 %v224, %v227
    %v229 = vrot.slane %v228, 4
    %v230 = vmax.f32 %v228, %v229
    %v231 = vrot.slane %v230, 2
    %v232 = vmax.f32 %v230, %v231
    %v233 = vrot.slane %v232, 1
    %v234 = vmax.f32 %v232, %v233
    %v235 = vmax.f32 %v162, %v174
    %v236 = vmax.f32 %v168, %v180
    %v237 = vmax.f32 %v235, %v186
    %v238 = vmax.f32 %v236, %v192
    %v239 = vmax.f32 %v237, %v198
    %v240 = vmax.f32 %v238, %v204
    %v241 = vmax.f32 %v239, %v210
    %v242 = vsel %vm225, %v216, -inf
    %v243 = vmax.f32 %v240, %v242
    %v244 = vmax.f32 %v241, %v243
    %v245 = vrot.slane %v244, 4
    %v246 = vmax.f32 %v244, %v245
    %v247 = vrot.slane %v246, 2
    %v248 = vmax.f32 %v246, %v247
    %v249 = vrot.slane %v248, 1
    %v250 = vmax.f32 %v248, %v249
    %v251 = vsub.f32 %v160, %v234
    %v252 = vsub.f32 %v162, %v250
    %v253 = vsub.f32 %v166, %v234
    %v254 = vsub.f32 %v168, %v250
    %v255 = vsub.f32 %v172, %v234
    %v256 = vsub.f32 %v174, %v250
    %v257 = vsub.f32 %v178, %v234
    %v258 = vsub.f32 %v180, %v250
    %v259 = vsub.f32 %v184, %v234
    %v260 = vsub.f32 %v186, %v250
    %v261 = vsub.f32 %v190, %v234
    %v262 = vsub.f32 %v192, %v250
    %v263 = vsub.f32 %v196, %v234
    %v264 = vsub.f32 %v198, %v250
    %v265 = vsub.f32 %v202, %v234
    %v266 = vsub.f32 %v204, %v250
    %v267 = vsub.f32 %v208, %v234
    %v268 = vsub.f32 %v210, %v250
    %v269 = vsub.f32 %v214, %v234
    %v270 = vsub.f32 %v216, %v250
    %v271 = vmul.f32 %v251, 1.442695
    %v272 = vpow.pop %v271
    %v273 = vmul.f32 %v252, 1.442695
    %v274 = vpow.pop %v273
    %v275 = vmul.f32 %v253, 1.442695
    %v276 = vpow.pop %v275
    %v277 = vmul.f32 %v254, 1.442695
    %v278 = vpow.pop %v277
    %v279 = vmul.f32 %v255, 1.442695
    %v280 = vpow.pop %v279
    %v281 = vmul.f32 %v256, 1.442695
    %v282 = vpow.pop %v281
    %v283 = vmul.f32 %v257, 1.442695
    %v284 = vpow.pop %v283
    %v285 = vmul.f32 %v258, 1.442695
    %v286 = vpow.pop %v285
    %v287 = vmul.f32 %v259, 1.442695
    %v288 = vpow.pop %v287
    %v289 = vmul.f32 %v260, 1.442695
    %v290 = vpow.pop %v289
    %v291 = vmul.f32 %v261, 1.442695
    %v292 = vpow.pop %v291
    %v293 = vmul.f32 %v262, 1.442695
    %v294 = vpow.pop %v293
    %v295 = vmul.f32 %v263, 1.442695
    %v296 = vpow.pop %v295
    %v297 = vmul.f32 %v264, 1.442695
    %v298 = vpow.pop %v297
    %v299 = vmul.f32 %v265, 1.442695
    %v300 = vpow.pop %v299
    %v301 = vmul.f32 %v266, 1.442695
    %v302 = vpow.pop %v301
    %v303 = vmul.f32 %v267, 1.442695
    %v304 = vpow.pop %v303
    %v305 = vmul.f32 %v268, 1.442695
    %v306 = vpow.pop %v305
    %v307 = vmul.f32 %v269, 1.442695
    %v308 = vpow.pop %v307
    %v309 = vmul.f32 %v270, 1.442695
    %v310 = vpow.pop %v309
    %v311 = vadd.f32 %v272, %v276
    %v312 = vadd.f32 %v311, %v280
    %v313 = vadd.f32 %v312, %v284
    %v314 = vadd.f32 %v313, %v288
    %v315 = vadd.f32 %v314, %v292
    %v316 = vadd.f32 %v315, %v296
    %v317 = vadd.f32 %v316, %v300
    %v318 = vadd.f32 %v317, %v304
    %v319 = vsel %vm225, %v308, 0.0
    %v320 = vadd.f32 %v318, %v319
    %v321 = vrot.slane %v320, 4
    %v322 = vadd.f32 %v320, %v321
    %v323 = vrot.slane %v322, 2
    %v324 = vadd.f32 %v322, %v323
    %v325 = vrot.slane %v324, 1
    %v326 = vadd.f32 %v324, %v325
    %v327 = vadd.f32 %v274, %v278
    %v328 = vadd.f32 %v327, %v282
    %v329 = vadd.f32 %v328, %v286
    %v330 = vadd.f32 %v329, %v290
    %v331 = vadd.f32 %v330, %v294
    %v332 = vadd.f32 %v331, %v298
    %v333 = vadd.f32 %v332, %v302
    %v334 = vadd.f32 %v333, %v306
    %v335 = vsel %vm225, %v310, 0.0
    %v336 = vadd.f32 %v334, %v335
    %v337 = vrot.slane %v336, 4
    %v338 = vadd.f32 %v336, %v337
    %v339 = vrot.slane %v338, 2
    %v340 = vadd.f32 %v338, %v339
    %v341 = vrot.slane %v340, 1
    %v342 = vadd.f32 %v340, %v341
    %v343 = vrcp.pop %v326
    %v344 = vrcp.pop %v342
    %v345 = vmul.f32 %v272, %v343
    %v346 = vmul.f32 %v274, %v344
    %v347 = vmul.f32 %v276, %v343
    %v348 = vmul.f32 %v278, %v344
    %v349 = vmul.f32 %v280, %v343
    %v350 = vmul.f32 %v282, %v344
    %v351 = vmul.f32 %v284, %v343
    %v352 = vmul.f32 %v286, %v344
    %v353 = vmul.f32 %v288, %v343
    %v354 = vmul.f32 %v290, %v344
    %v355 = vmul.f32 %v292, %v343
    %v356 = vmul.f32 %v294, %v344
    %v357 = vmul.f32 %v296, %v343
    %v358 = vmul.f32 %v298, %v344
    %v359 = vmul.f32 %v300, %v343
    %v360 = vmul.f32 %v302, %v344
    %v361 = vmul.f32 %v304, %v343
    %v362 = vmul.f32 %v306, %v344
    %v363 = vmul.f32 %v308, %v343
    %v364 = vmul.f32 %v310, %v344
    %v365 = vld [vmem:[%s2] sm:$0xf]
    %v366 = vmul.f32 %v345, %v25
    %v367 = vmul.f32 %v346, %v26
    %v368 = vmul.f32 %v347, %v27
    %v369 = vmul.f32 %v348, %v28
    %v370 = vmul.f32 %v349, %v29
    %v371 = vmul.f32 %v350, %v30
    %v372 = vmul.f32 %v351, %v31
    %v373 = vmul.f32 %v352, %v32
    %v374 = vmul.f32 %v353, %v33
    %v375 = vmul.f32 %v354, %v34
    %v376 = vmul.f32 %v355, %v35
    %v377 = vmul.f32 %v356, %v36
    %v378 = vmul.f32 %v357, %v37
    %v379 = vmul.f32 %v358, %v38
    %v380 = vmul.f32 %v359, %v39
    %v381 = vmul.f32 %v360, %v40
    %v382 = vmul.f32 %v361, %v41
    %v383 = vmul.f32 %v362, %v42
    %v384 = vmul.f32 %v363, %v43
    %v385 = vmul.f32 %v364, %v44
    %s386 = scalar_lea.vmem %s1, 80
    %v387 = vld [vmem:[%s386] sm:$0xff]
    %v388 = vld [vmem:[%s386 + $0x8] sm:$0xff]
    %v389 = vld [vmem:[%s386 + $0x10] sm:$0xff]
    %v390 = vld [vmem:[%s386 + $0x18] sm:$0xff]
    %v391 = vld [vmem:[%s386 + $0x20] sm:$0xff]
    %v392 = vld [vmem:[%s386 + $0x28] sm:$0xff]
    %v393 = vld [vmem:[%s386 + $0x30] sm:$0xff]
    %v394 = vld [vmem:[%s386 + $0x38] sm:$0xff]
    %v395 = vld [vmem:[%s386 + $0x40] sm:$0xff]
    %v396 = vld [vmem:[%s386 + $0x48] sm:$0x1f]
    %v398 = vsel %vm57, %v387, 0
    %v401 = vsel %vm57, %v388, 0
    %v404 = vsel %vm57, %v389, 0
    %v407 = vsel %vm57, %v390, 0
    %v410 = vsel %vm57, %v391, 0
    %v413 = vsel %vm57, %v392, 0
    %v416 = vsel %vm57, %v393, 0
    %v419 = vsel %vm57, %v394, 0
    %v422 = vsel %vm57, %v395, 0
    %v425 = vsel %vm57, %v396, 0
    %427 = vmatprep.subr.mxu0 0.0
    %428 = vmatpush1.msra.mxu0 0.0
    %429 = vmatprep.subr.mxu0 0.0
    %430 = vmatpush1.msra.mxu0 0.0
    %431 = vmatprep.subr.mxu0 0.0
    %432 = vmatpush1.msra.mxu0 0.0
    %433 = vmatprep.subr.mxu0 0.0
    %434 = vmatpush1.msra.mxu0 0.0
    %435 = vmatprep.subr.mxu0 0.0
    %436 = vmatpush1.msra.mxu0 0.0
    %437 = vmatprep.subr.mxu0 0.0
    %438 = vmatpush1.msra.mxu0 0.0
    %439 = vmatprep.subr.mxu0 0.0
    %440 = vmatpush1.msra.mxu0 0.0
    %441 = vmatprep.subr.mxu0 0.0
    %442 = vmatpush1.msra.mxu0 0.0
    %443 = vmatprep.subr.mxu0 0.0
    %444 = vmatpush1.msra.mxu0 0.0
    %445 = vmatprep.subr.mxu0 0.0
    %446 = vmatpush1.msra.mxu0 0.0
    %447 = vmatprep.subr.mxu0 0.0
    %448 = vmatpush1.msra.mxu0 0.0
    %449 = vmatprep.subr.mxu0 0.0
    %450 = vmatpush1.msra.mxu0 0.0
    %451 = vmatprep.subr.mxu0 0.0
    %452 = vmatpush1.msra.mxu0 0.0
    %453 = vmatprep.subr.mxu0 0.0
    %454 = vmatpush1.msra.mxu0 0.0
    %455 = vmatprep.subr.mxu0 0.0
    %456 = vmatpush1.msra.mxu0 0.0
    %457 = vmatprep.subr.mxu0 %v91
    %458 = vmatpush1.msra.mxu0 %v89
    %459 = vmatprep.subr.mxu0 0.0
    %460 = vmatpush2.msra.mxu0 0.0
    %461 = vmatprep.subr.mxu0 0.0
    %462 = vmatpush2.msra.mxu0 0.0
    %463 = vmatprep.subr.mxu0 0.0
    %464 = vmatpush2.msra.mxu0 0.0
    %465 = vmatprep.subr.mxu0 0.0
    %466 = vmatpush2.msra.mxu0 0.0
    %467 = vmatprep.subr.mxu0 0.0
    %468 = vmatpush2.msra.mxu0 0.0
    %469 = vmatprep.subr.mxu0 0.0
    %470 = vmatpush2.msra.mxu0 0.0
    %471 = vmatprep.subr.mxu0 0.0
    %472 = vmatpush2.msra.mxu0 0.0
    %473 = vmatprep.subr.mxu0 0.0
    %474 = vmatpush2.msra.mxu0 0.0
    %475 = vmatprep.subr.mxu0 0.0
    %476 = vmatpush2.msra.mxu0 0.0
    %477 = vmatprep.subr.mxu0 0.0
    %478 = vmatpush2.msra.mxu0 0.0
    %479 = vmatprep.subr.mxu0 0.0
    %480 = vmatpush2.msra.mxu0 0.0
    %481 = vmatprep.subr.mxu0 0.0
    %482 = vmatpush2.msra.mxu0 0.0
    %483 = vmatprep.subr.mxu0 0.0
    %484 = vmatpush2.msra.mxu0 0.0
    %485 = vmatprep.subr.mxu0 0.0
    %486 = vmatpush2.msra.mxu0 0.0
    %487 = vmatprep.subr.mxu0 0.0
    %488 = vmatpush2.msra.mxu0 0.0
    %489 = vmatprep.subr.mxu0 0.0
    %490 = vmatpush2.msra.mxu0 0.0
    %491 = vmatprep.mubr.f32.mxu0 0.0
    %492 = vmatmul.mubr.f32.gmra.mxu0 %v398
    %v493 = vpop.f32.mrf.mxu0
    %v494 = vadd.f32 0.0, %v493
    %v495 = vpop.f32.mrf.mxu0
    %v496 = vadd.f32 0.0, %v495
    %497 = vmatprep.mubr.f32.mxu0 0.0
    %498 = vmatmul.mubr.f32.gmra.mxu0 %v401
    %v499 = vpop.f32.mrf.mxu0
    %v500 = vadd.f32 0.0, %v499
    %v501 = vpop.f32.mrf.mxu0
    %v502 = vadd.f32 0.0, %v501
    %503 = vmatprep.mubr.f32.mxu0 0.0
    %504 = vmatmul.mubr.f32.gmra.mxu0 %v404
    %v505 = vpop.f32.mrf.mxu0
    %v506 = vadd.f32 0.0, %v505
    %v507 = vpop.f32.mrf.mxu0
    %v508 = vadd.f32 0.0, %v507
    %509 = vmatprep.mubr.f32.mxu0 0.0
    %510 = vmatmul.mubr.f32.gmra.mxu0 %v407
    %v511 = vpop.f32.mrf.mxu0
    %v512 = vadd.f32 0.0, %v511
    %v513 = vpop.f32.mrf.mxu0
    %v514 = vadd.f32 0.0, %v513
    %515 = vmatprep.mubr.f32.mxu0 0.0
    %516 = vmatmul.mubr.f32.gmra.mxu0 %v410
    %v517 = vpop.f32.mrf.mxu0
    %v518 = vadd.f32 0.0, %v517
    %v519 = vpop.f32.mrf.mxu0
    %v520 = vadd.f32 0.0, %v519
    %521 = vmatprep.mubr.f32.mxu0 0.0
    %522 = vmatmul.mubr.f32.gmra.mxu0 %v413
    %v523 = vpop.f32.mrf.mxu0
    %v524 = vadd.f32 0.0, %v523
    %v525 = vpop.f32.mrf.mxu0
    %v526 = vadd.f32 0.0, %v525
    %527 = vmatprep.mubr.f32.mxu0 0.0
    %528 = vmatmul.mubr.f32.gmra.mxu0 %v416
    %v529 = vpop.f32.mrf.mxu0
    %v530 = vadd.f32 0.0, %v529
    %v531 = vpop.f32.mrf.mxu0
    %v532 = vadd.f32 0.0, %v531
    %533 = vmatprep.mubr.f32.mxu0 0.0
    %534 = vmatmul.mubr.f32.gmra.mxu0 %v419
    %v535 = vpop.f32.mrf.mxu0
    %v536 = vadd.f32 0.0, %v535
    %v537 = vpop.f32.mrf.mxu0
    %v538 = vadd.f32 0.0, %v537
    %539 = vmatprep.mubr.f32.mxu0 0.0
    %540 = vmatmul.mubr.f32.gmra.mxu0 %v422
    %v541 = vpop.f32.mrf.mxu0
    %v542 = vadd.f32 0.0, %v541
    %v543 = vpop.f32.mrf.mxu0
    %v544 = vadd.f32 0.0, %v543
    %545 = vmatprep.mubr.f32.mxu0 0.0
    %546 = vmatmul.mubr.f32.gmra.mxu0 %v425
    %v547 = vpop.f32.mrf.mxu0
    %v548 = vadd.f32 0.0, %v547
    %v549 = vpop.f32.mrf.mxu0
    %v550 = vadd.f32 0.0, %v549
    %551 = vdwg.mxu0
    %v552 = vmax.f32 %v494, %v506
    %v553 = vmax.f32 %v500, %v512
    %v554 = vmax.f32 %v552, %v518
    %v555 = vmax.f32 %v553, %v524
    %v556 = vmax.f32 %v554, %v530
    %v557 = vmax.f32 %v555, %v536
    %v558 = vmax.f32 %v556, %v542
    %v559 = vsel %vm225, %v548, -inf
    %v560 = vmax.f32 %v557, %v559
    %v561 = vmax.f32 %v558, %v560
    %v562 = vrot.slane %v561, 4
    %v563 = vmax.f32 %v561, %v562
    %v564 = vrot.slane %v563, 2
    %v565 = vmax.f32 %v563, %v564
    %v566 = vrot.slane %v565, 1
    %v567 = vmax.f32 %v565, %v566
    %v568 = vmax.f32 %v496, %v508
    %v569 = vmax.f32 %v502, %v514
    %v570 = vmax.f32 %v568, %v520
    %v571 = vmax.f32 %v569, %v526
    %v572 = vmax.f32 %v570, %v532
    %v573 = vmax.f32 %v571, %v538
    %v574 = vmax.f32 %v572, %v544
    %v575 = vsel %vm225, %v550, -inf
    %v576 = vmax.f32 %v573, %v575
    %v577 = vmax.f32 %v574, %v576
    %v578 = vrot.slane %v577, 4
    %v579 = vmax.f32 %v577, %v578
    %v580 = vrot.slane %v579, 2
    %v581 = vmax.f32 %v579, %v580
    %v582 = vrot.slane %v581, 1
    %v583 = vmax.f32 %v581, %v582
    %v584 = vsub.f32 %v494, %v567
    %v585 = vsub.f32 %v496, %v583
    %v586 = vsub.f32 %v500, %v567
    %v587 = vsub.f32 %v502, %v583
    %v588 = vsub.f32 %v506, %v567
    %v589 = vsub.f32 %v508, %v583
    %v590 = vsub.f32 %v512, %v567
    %v591 = vsub.f32 %v514, %v583
    %v592 = vsub.f32 %v518, %v567
    %v593 = vsub.f32 %v520, %v583
    %v594 = vsub.f32 %v524, %v567
    %v595 = vsub.f32 %v526, %v583
    %v596 = vsub.f32 %v530, %v567
    %v597 = vsub.f32 %v532, %v583
    %v598 = vsub.f32 %v536, %v567
    %v599 = vsub.f32 %v538, %v583
    %v600 = vsub.f32 %v542, %v567
    %v601 = vsub.f32 %v544, %v583
    %v602 = vsub.f32 %v548, %v567
    %v603 = vsub.f32 %v550, %v583
    %v604 = vmul.f32 %v584, 1.442695
    %v605 = vpow.pop %v604
    %v606 = vmul.f32 %v585, 1.442695
    %v607 = vpow.pop %v606
    %v608 = vmul.f32 %v586, 1.442695
    %v609 = vpow.pop %v608
    %v610 = vmul.f32 %v587, 1.442695
    %v611 = vpow.pop %v610
    %v612 = vmul.f32 %v588, 1.442695
    %v613 = vpow.pop %v612
    %v614 = vmul.f32 %v589, 1.442695
    %v615 = vpow.pop %v614
    %v616 = vmul.f32 %v590, 1.442695
    %v617 = vpow.pop %v616
    %v618 = vmul.f32 %v591, 1.442695
    %v619 = vpow.pop %v618
    %v620 = vmul.f32 %v592, 1.442695
    %v621 = vpow.pop %v620
    %v622 = vmul.f32 %v593, 1.442695
    %v623 = vpow.pop %v622
    %v624 = vmul.f32 %v594, 1.442695
    %v625 = vpow.pop %v624
    %v626 = vmul.f32 %v595, 1.442695
    %v627 = vpow.pop %v626
    %v628 = vmul.f32 %v596, 1.442695
    %v629 = vpow.pop %v628
    %v630 = vmul.f32 %v597, 1.442695
    %v631 = vpow.pop %v630
    %v632 = vmul.f32 %v598, 1.442695
    %v633 = vpow.pop %v632
    %v634 = vmul.f32 %v599, 1.442695
    %v635 = vpow.pop %v634
    %v636 = vmul.f32 %v600, 1.442695
    %v637 = vpow.pop %v636
    %v638 = vmul.f32 %v601, 1.442695
    %v639 = vpow.pop %v638
    %v640 = vmul.f32 %v602, 1.442695
    %v641 = vpow.pop %v640
    %v642 = vmul.f32 %v603, 1.442695
    %v643 = vpow.pop %v642
    %v644 = vadd.f32 %v605, %v609
    %v645 = vadd.f32 %v644, %v613
    %v646 = vadd.f32 %v645, %v617
    %v647 = vadd.f32 %v646, %v621
    %v648 = vadd.f32 %v647, %v625
    %v649 = vadd.f32 %v648, %v629
    %v650 = vadd.f32 %v649, %v633
    %v651 = vadd.f32 %v650, %v637
    %v652 = vsel %vm225, %v641, 0.0
    %v653 = vadd.f32 %v651, %v652
    %v654 = vrot.slane %v653, 4
    %v655 = vadd.f32 %v653, %v654
    %v656 = vrot.slane %v655, 2
    %v657 = vadd.f32 %v655, %v656
    %v658 = vrot.slane %v657, 1
    %v659 = vadd.f32 %v657, %v658
    %v660 = vadd.f32 %v607, %v611
    %v661 = vadd.f32 %v660, %v615
    %v662 = vadd.f32 %v661, %v619
    %v663 = vadd.f32 %v662, %v623
    %v664 = vadd.f32 %v663, %v627
    %v665 = vadd.f32 %v664, %v631
    %v666 = vadd.f32 %v665, %v635
    %v667 = vadd.f32 %v666, %v639
    %v668 = vsel %vm225, %v643, 0.0
    %v669 = vadd.f32 %v667, %v668
    %v670 = vrot.slane %v669, 4
    %v671 = vadd.f32 %v669, %v670
    %v672 = vrot.slane %v671, 2
    %v673 = vadd.f32 %v671, %v672
    %v674 = vrot.slane %v673, 1
    %v675 = vadd.f32 %v673, %v674
    %v676 = vrcp.pop %v659
    %v677 = vrcp.pop %v675
    %v678 = vmul.f32 %v605, %v676
    %v679 = vmul.f32 %v607, %v677
    %v680 = vmul.f32 %v609, %v676
    %v681 = vmul.f32 %v611, %v677
    %v682 = vmul.f32 %v613, %v676
    %v683 = vmul.f32 %v615, %v677
    %v684 = vmul.f32 %v617, %v676
    %v685 = vmul.f32 %v619, %v677
    %v686 = vmul.f32 %v621, %v676
    %v687 = vmul.f32 %v623, %v677
    %v688 = vmul.f32 %v625, %v676
    %v689 = vmul.f32 %v627, %v677
    %v690 = vmul.f32 %v629, %v676
    %v691 = vmul.f32 %v631, %v677
    %v692 = vmul.f32 %v633, %v676
    %v693 = vmul.f32 %v635, %v677
    %v694 = vmul.f32 %v637, %v676
    %v695 = vmul.f32 %v639, %v677
    %v696 = vmul.f32 %v641, %v676
    %v697 = vmul.f32 %v643, %v677
    %s698 = scalar_lea.vmem %s2, 4
    %v699 = vld [vmem:[%s698] sm:$0xf]
    %v700 = vmul.f32 %v678, %v25
    %v701 = vmul.f32 %v679, %v26
    %v702 = vmul.f32 %v680, %v27
    %v703 = vmul.f32 %v681, %v28
    %v704 = vmul.f32 %v682, %v29
    %v705 = vmul.f32 %v683, %v30
    %v706 = vmul.f32 %v684, %v31
    %v707 = vmul.f32 %v685, %v32
    %v708 = vmul.f32 %v686, %v33
    %v709 = vmul.f32 %v687, %v34
    %v710 = vmul.f32 %v688, %v35
    %v711 = vmul.f32 %v689, %v36
    %v712 = vmul.f32 %v690, %v37
    %v713 = vmul.f32 %v691, %v38
    %v714 = vmul.f32 %v692, %v39
    %v715 = vmul.f32 %v693, %v40
    %v716 = vmul.f32 %v694, %v41
    %v717 = vmul.f32 %v695, %v42
    %v718 = vmul.f32 %v696, %v43
    %v719 = vmul.f32 %v697, %v44
    %vm720 = vcmask 629760
    %v722 = vsel %vm720, %v699, 0
    %v725 = vsel %vm225, %v718, 0
    %v728 = vsel %vm225, %v719, 0
    %730 = vmatprep.subr.mxu0 0.0
    %731 = vmatpush1.msra.mxu0 0.0
    %732 = vmatprep.subr.mxu0 0.0
    %733 = vmatpush1.msra.mxu0 0.0
    %734 = vmatprep.subr.mxu0 0.0
    %735 = vmatpush1.msra.mxu0 0.0
    %736 = vmatprep.subr.mxu0 0.0
    %737 = vmatpush1.msra.mxu0 0.0
    %738 = vmatprep.subr.mxu0 0.0
    %739 = vmatpush1.msra.mxu0 0.0
    %740 = vmatprep.subr.mxu0 0.0
    %741 = vmatpush1.msra.mxu0 0.0
    %742 = vmatprep.subr.mxu0 %v728
    %743 = vmatpush1.msra.mxu0 %v725
    %744 = vmatprep.subr.mxu0 %v717
    %745 = vmatpush1.msra.mxu0 %v716
    %746 = vmatprep.subr.mxu0 %v715
    %747 = vmatpush1.msra.mxu0 %v714
    %748 = vmatprep.subr.mxu0 %v713
    %749 = vmatpush1.msra.mxu0 %v712
    %750 = vmatprep.subr.mxu0 %v711
    %751 = vmatpush1.msra.mxu0 %v710
    %752 = vmatprep.subr.mxu0 %v709
    %753 = vmatpush1.msra.mxu0 %v708
    %754 = vmatprep.subr.mxu0 %v707
    %755 = vmatpush1.msra.mxu0 %v706
    %756 = vmatprep.subr.mxu0 %v705
    %757 = vmatpush1.msra.mxu0 %v704
    %758 = vmatprep.subr.mxu0 %v703
    %759 = vmatpush1.msra.mxu0 %v702
    %760 = vmatprep.subr.mxu0 %v701
    %761 = vmatpush1.msra.mxu0 %v700
    %762 = vmatprep.subr.mxu0 0.0
    %763 = vmatpush2.msra.mxu0 0.0
    %764 = vmatprep.subr.mxu0 0.0
    %765 = vmatpush2.msra.mxu0 0.0
    %766 = vmatprep.subr.mxu0 0.0
    %767 = vmatpush2.msra.mxu0 0.0
    %768 = vmatprep.subr.mxu0 0.0
    %769 = vmatpush2.msra.mxu0 0.0
    %770 = vmatprep.subr.mxu0 0.0
    %771 = vmatpush2.msra.mxu0 0.0
    %772 = vmatprep.subr.mxu0 0.0
    %773 = vmatpush2.msra.mxu0 0.0
    %774 = vmatprep.subr.mxu0 0.0
    %775 = vmatpush2.msra.mxu0 0.0
    %776 = vmatprep.subr.mxu0 0.0
    %777 = vmatpush2.msra.mxu0 0.0
    %778 = vmatprep.subr.mxu0 0.0
    %779 = vmatpush2.msra.mxu0 0.0
    %780 = vmatprep.subr.mxu0 0.0
    %781 = vmatpush2.msra.mxu0 0.0
    %782 = vmatprep.subr.mxu0 0.0
    %783 = vmatpush2.msra.mxu0 0.0
    %784 = vmatprep.subr.mxu0 0.0
    %785 = vmatpush2.msra.mxu0 0.0
    %786 = vmatprep.subr.mxu0 0.0
    %787 = vmatpush2.msra.mxu0 0.0
    %788 = vmatprep.subr.mxu0 0.0
    %789 = vmatpush2.msra.mxu0 0.0
    %790 = vmatprep.subr.mxu0 0.0
    %791 = vmatpush2.msra.mxu0 0.0
    %792 = vmatprep.subr.mxu0 0.0
    %793 = vmatpush2.msra.mxu0 0.0
    %794 = vmatprep.mubr.f32.mxu0 0.0
    %795 = vmatmul.mubr.f32.gmra.mxu0 %v722
    %v796 = vpop.f32.mrf.mxu0
    %v797 = vadd.f32 0.0, %v796
    %v798 = vpop.f32.mrf.mxu0
    %v799 = vadd.f32 0.0, %v798
    %800 = vdwg.mxu0
    %v802 = vsel %vm720, %v365, 0
    %v805 = vsel %vm225, %v384, 0
    %v808 = vsel %vm225, %v385, 0
    %810 = vmatprep.subr.mxu0 0.0
    %811 = vmatpush1.msra.mxu0 0.0
    %812 = vmatprep.subr.mxu0 0.0
    %813 = vmatpush1.msra.mxu0 0.0
    %814 = vmatprep.subr.mxu0 0.0
    %815 = vmatpush1.msra.mxu0 0.0
    %816 = vmatprep.subr.mxu0 0.0
    %817 = vmatpush1.msra.mxu0 0.0
    %818 = vmatprep.subr.mxu0 0.0
    %819 = vmatpush1.msra.mxu0 0.0
    %820 = vmatprep.subr.mxu0 0.0
    %821 = vmatpush1.msra.mxu0 0.0
    %822 = vmatprep.subr.mxu0 %v808
    %823 = vmatpush1.msra.mxu0 %v805
    %824 = vmatprep.subr.mxu0 %v383
    %825 = vmatpush1.msra.mxu0 %v382
    %826 = vmatprep.subr.mxu0 %v381
    %827 = vmatpush1.msra.mxu0 %v380
    %828 = vmatprep.subr.mxu0 %v379
    %829 = vmatpush1.msra.mxu0 %v378
    %830 = vmatprep.subr.mxu0 %v377
    %831 = vmatpush1.msra.mxu0 %v376
    %832 = vmatprep.subr.mxu0 %v375
    %833 = vmatpush1.msra.mxu0 %v374
    %834 = vmatprep.subr.mxu0 %v373
    %835 = vmatpush1.msra.mxu0 %v372
    %836 = vmatprep.subr.mxu0 %v371
    %837 = vmatpush1.msra.mxu0 %v370
    %838 = vmatprep.subr.mxu0 %v369
    %839 = vmatpush1.msra.mxu0 %v368
    %840 = vmatprep.subr.mxu0 %v367
    %841 = vmatpush1.msra.mxu0 %v366
    %842 = vmatprep.subr.mxu0 0.0
    %843 = vmatpush2.msra.mxu0 0.0
    %844 = vmatprep.subr.mxu0 0.0
    %845 = vmatpush2.msra.mxu0 0.0
    %846 = vmatprep.subr.mxu0 0.0
    %847 = vmatpush2.msra.mxu0 0.0
    %848 = vmatprep.subr.mxu0 0.0
    %849 = vmatpush2.msra.mxu0 0.0
    %850 = vmatprep.subr.mxu0 0.0
    %851 = vmatpush2.msra.mxu0 0.0
    %852 = vmatprep.subr.mxu0 0.0
    %853 = vmatpush2.msra.mxu0 0.0
    %854 = vmatprep.subr.mxu0 0.0
    %855 = vmatpush2.msra.mxu0 0.0
    %856 = vmatprep.subr.mxu0 0.0
    %857 = vmatpush2.msra.mxu0 0.0
    %858 = vmatprep.subr.mxu0 0.0
    %859 = vmatpush2.msra.mxu0 0.0
    %860 = vmatprep.subr.mxu0 0.0
    %861 = vmatpush2.msra.mxu0 0.0
    %862 = vmatprep.subr.mxu0 0.0
    %863 = vmatpush2.msra.mxu0 0.0
    %864 = vmatprep.subr.mxu0 0.0
    %865 = vmatpush2.msra.mxu0 0.0
    %866 = vmatprep.subr.mxu0 0.0
    %867 = vmatpush2.msra.mxu0 0.0
    %868 = vmatprep.subr.mxu0 0.0
    %869 = vmatpush2.msra.mxu0 0.0
    %870 = vmatprep.subr.mxu0 0.0
    %871 = vmatpush2.msra.mxu0 0.0
    %872 = vmatprep.subr.mxu0 0.0
    %873 = vmatpush2.msra.mxu0 0.0
    %874 = vmatprep.mubr.f32.mxu0 0.0
    %875 = vmatmul.mubr.f32.gmra.mxu0 %v802
    %v876 = vpop.f32.mrf.mxu0
    %v877 = vadd.f32 %v797, %v876
    %v878 = vpop.f32.mrf.mxu0
    %v879 = vadd.f32 %v799, %v878
    %880 = vdwg.mxu0
    %s881 = scalar_lea.vmem %s1, 160
    %v882 = vld [vmem:[%s881] sm:$0xff]
    %v883 = vld [vmem:[%s881 + $0x8] sm:$0xff]
    %v884 = vld [vmem:[%s881 + $0x10] sm:$0xff]
    %v885 = vld [vmem:[%s881 + $0x18] sm:$0xff]
    %v886 = vld [vmem:[%s881 + $0x20] sm:$0xff]
    %v887 = vld [vmem:[%s881 + $0x28] sm:$0xff]
    %v888 = vld [vmem:[%s881 + $0x30] sm:$0xff]
    %v889 = vld [vmem:[%s881 + $0x38] sm:$0xff]
    %v890 = vld [vmem:[%s881 + $0x40] sm:$0xff]
    %v891 = vld [vmem:[%s881 + $0x48] sm:$0x1f]
    %v893 = vsel %vm57, %v882, 0
    %v896 = vsel %vm57, %v883, 0
    %v899 = vsel %vm57, %v884, 0
    %v902 = vsel %vm57, %v885, 0
    %v905 = vsel %vm57, %v886, 0
    %v908 = vsel %vm57, %v887, 0
    %v911 = vsel %vm57, %v888, 0
    %v914 = vsel %vm57, %v889, 0
    %v917 = vsel %vm57, %v890, 0
    %v920 = vsel %vm57, %v891, 0
    %922 = vmatprep.subr.mxu0 0.0
    %923 = vmatpush1.msra.mxu0 0.0
    %924 = vmatprep.subr.mxu0 0.0
    %925 = vmatpush1.msra.mxu0 0.0
    %926 = vmatprep.subr.mxu0 0.0
    %927 = vmatpush1.msra.mxu0 0.0
    %928 = vmatprep.subr.mxu0 0.0
    %929 = vmatpush1.msra.mxu0 0.0
    %930 = vmatprep.subr.mxu0 0.0
    %931 = vmatpush1.msra.mxu0 0.0
    %932 = vmatprep.subr.mxu0 0.0
    %933 = vmatpush1.msra.mxu0 0.0
    %934 = vmatprep.subr.mxu0 0.0
    %935 = vmatpush1.msra.mxu0 0.0
    %936 = vmatprep.subr.mxu0 0.0
    %937 = vmatpush1.msra.mxu0 0.0
    %938 = vmatprep.subr.mxu0 0.0
    %939 = vmatpush1.msra.mxu0 0.0
    %940 = vmatprep.subr.mxu0 0.0
    %941 = vmatpush1.msra.mxu0 0.0
    %942 = vmatprep.subr.mxu0 0.0
    %943 = vmatpush1.msra.mxu0 0.0
    %944 = vmatprep.subr.mxu0 0.0
    %945 = vmatpush1.msra.mxu0 0.0
    %946 = vmatprep.subr.mxu0 0.0
    %947 = vmatpush1.msra.mxu0 0.0
    %948 = vmatprep.subr.mxu0 0.0
    %949 = vmatpush1.msra.mxu0 0.0
    %950 = vmatprep.subr.mxu0 0.0
    %951 = vmatpush1.msra.mxu0 0.0
    %952 = vmatprep.subr.mxu0 %v91
    %953 = vmatpush1.msra.mxu0 %v89
    %954 = vmatprep.subr.mxu0 0.0
    %955 = vmatpush2.msra.mxu0 0.0
    %956 = vmatprep.subr.mxu0 0.0
    %957 = vmatpush2.msra.mxu0 0.0
    %958 = vmatprep.subr.mxu0 0.0
    %959 = vmatpush2.msra.mxu0 0.0
    %960 = vmatprep.subr.mxu0 0.0
    %961 = vmatpush2.msra.mxu0 0.0
    %962 = vmatprep.subr.mxu0 0.0
    %963 = vmatpush2.msra.mxu0 0.0
    %964 = vmatprep.subr.mxu0 0.0
    %965 = vmatpush2.msra.mxu0 0.0
    %966 = vmatprep.subr.mxu0 0.0
    %967 = vmatpush2.msra.mxu0 0.0
    %968 = vmatprep.subr.mxu0 0.0
    %969 = vmatpush2.msra.mxu0 0.0
    %970 = vmatprep.subr.mxu0 0.0
    %971 = vmatpush2.msra.mxu0 0.0
    %972 = vmatprep.subr.mxu0 0.0
    %973 = vmatpush2.msra.mxu0 0.0
    %974 = vmatprep.subr.mxu0 0.0
    %975 = vmatpush2.msra.mxu0 0.0
    %976 = vmatprep.subr.mxu0 0.0
    %977 = vmatpush2.msra.mxu0 0.0
    %978 = vmatprep.subr.mxu0 0.0
    %979 = vmatpush2.msra.mxu0 0.0
    %980 = vmatprep.subr.mxu0 0.0
    %981 = vmatpush2.msra.mxu0 0.0
    %982 = vmatprep.subr.mxu0 0.0
    %983 = vmatpush2.msra.mxu0 0.0
    %984 = vmatprep.subr.mxu0 0.0
    %985 = vmatpush2.msra.mxu0 0.0
    %986 = vmatprep.mubr.f32.mxu0 0.0
    %987 = vmatmul.mubr.f32.gmra.mxu0 %v893
    %v988 = vpop.f32.mrf.mxu0
    %v989 = vadd.f32 0.0, %v988
    %v990 = vpop.f32.mrf.mxu0
    %v991 = vadd.f32 0.0, %v990
    %992 = vmatprep.mubr.f32.mxu0 0.0
    %993 = vmatmul.mubr.f32.gmra.mxu0 %v896
    %v994 = vpop.f32.mrf.mxu0
    %v995 = vadd.f32 0.0, %v994
    %v996 = vpop.f32.mrf.mxu0
    %v997 = vadd.f32 0.0, %v996
    %998 = vmatprep.mubr.f32.mxu0 0.0
    %999 = vmatmul.mubr.f32.gmra.mxu0 %v899
    %v1000 = vpop.f32.mrf.mxu0
    %v1001 = vadd.f32 0.0, %v1000
    %v1002 = vpop.f32.mrf.mxu0
    %v1003 = vadd.f32 0.0, %v1002
    %1004 = vmatprep.mubr.f32.mxu0 0.0
    %1005 = vmatmul.mubr.f32.gmra.mxu0 %v902
    %v1006 = vpop.f32.mrf.mxu0
    %v1007 = vadd.f32 0.0, %v1006
    %v1008 = vpop.f32.mrf.mxu0
    %v1009 = vadd.f32 0.0, %v1008
    %1010 = vmatprep.mubr.f32.mxu0 0.0
    %1011 = vmatmul.mubr.f32.gmra.mxu0 %v905
    %v1012 = vpop.f32.mrf.mxu0
    %v1013 = vadd.f32 0.0, %v1012
    %v1014 = vpop.f32.mrf.mxu0
    %v1015 = vadd.f32 0.0, %v1014
    %1016 = vmatprep.mubr.f32.mxu0 0.0
    %1017 = vmatmul.mubr.f32.gmra.mxu0 %v908
    %v1018 = vpop.f32.mrf.mxu0
    %v1019 = vadd.f32 0.0, %v1018
    %v1020 = vpop.f32.mrf.mxu0
    %v1021 = vadd.f32 0.0, %v1020
    %1022 = vmatprep.mubr.f32.mxu0 0.0
    %1023 = vmatmul.mubr.f32.gmra.mxu0 %v911
    %v1024 = vpop.f32.mrf.mxu0
    %v1025 = vadd.f32 0.0, %v1024
    %v1026 = vpop.f32.mrf.mxu0
    %v1027 = vadd.f32 0.0, %v1026
    %1028 = vmatprep.mubr.f32.mxu0 0.0
    %1029 = vmatmul.mubr.f32.gmra.mxu0 %v914
    %v1030 = vpop.f32.mrf.mxu0
    %v1031 = vadd.f32 0.0, %v1030
    %v1032 = vpop.f32.mrf.mxu0
    %v1033 = vadd.f32 0.0, %v1032
    %1034 = vmatprep.mubr.f32.mxu0 0.0
    %1035 = vmatmul.mubr.f32.gmra.mxu0 %v917
    %v1036 = vpop.f32.mrf.mxu0
    %v1037 = vadd.f32 0.0, %v1036
    %v1038 = vpop.f32.mrf.mxu0
    %v1039 = vadd.f32 0.0, %v1038
    %1040 = vmatprep.mubr.f32.mxu0 0.0
    %1041 = vmatmul.mubr.f32.gmra.mxu0 %v920
    %v1042 = vpop.f32.mrf.mxu0
    %v1043 = vadd.f32 0.0, %v1042
    %v1044 = vpop.f32.mrf.mxu0
    %v1045 = vadd.f32 0.0, %v1044
    %1046 = vdwg.mxu0
    %v1047 = vmax.f32 %v989, %v1001
    %v1048 = vmax.f32 %v995, %v1007
    %v1049 = vmax.f32 %v1047, %v1013
    %v1050 = vmax.f32 %v1048, %v1019
    %v1051 = vmax.f32 %v1049, %v1025
    %v1052 = vmax.f32 %v1050, %v1031
    %v1053 = vmax.f32 %v1051, %v1037
    %v1054 = vsel %vm225, %v1043, -inf
    %v1055 = vmax.f32 %v1052, %v1054
    %v1056 = vmax.f32 %v1053, %v1055
    %v1057 = vrot.slane %v1056, 4
    %v1058 = vmax.f32 %v1056, %v1057
    %v1059 = vrot.slane %v1058, 2
    %v1060 = vmax.f32 %v1058, %v1059
    %v1061 = vrot.slane %v1060, 1
    %v1062 = vmax.f32 %v1060, %v1061
    %v1063 = vmax.f32 %v991, %v1003
    %v1064 = vmax.f32 %v997, %v1009
    %v1065 = vmax.f32 %v1063, %v1015
    %v1066 = vmax.f32 %v1064, %v1021
    %v1067 = vmax.f32 %v1065, %v1027
    %v1068 = vmax.f32 %v1066, %v1033
    %v1069 = vmax.f32 %v1067, %v1039
    %v1070 = vsel %vm225, %v1045, -inf
    %v1071 = vmax.f32 %v1068, %v1070
    %v1072 = vmax.f32 %v1069, %v1071
    %v1073 = vrot.slane %v1072, 4
    %v1074 = vmax.f32 %v1072, %v1073
    %v1075 = vrot.slane %v1074, 2
    %v1076 = vmax.f32 %v1074, %v1075
    %v1077 = vrot.slane %v1076, 1
    %v1078 = vmax.f32 %v1076, %v1077
    %v1079 = vsub.f32 %v989, %v1062
    %v1080 = vsub.f32 %v991, %v1078
    %v1081 = vsub.f32 %v995, %v1062
    %v1082 = vsub.f32 %v997, %v1078
    %v1083 = vsub.f32 %v1001, %v1062
    %v1084 = vsub.f32 %v1003, %v1078
    %v1085 = vsub.f32 %v1007, %v1062
    %v1086 = vsub.f32 %v1009, %v1078
    %v1087 = vsub.f32 %v1013, %v1062
    %v1088 = vsub.f32 %v1015, %v1078
    %v1089 = vsub.f32 %v1019, %v1062
    %v1090 = vsub.f32 %v1021, %v1078
    %v1091 = vsub.f32 %v1025, %v1062
    %v1092 = vsub.f32 %v1027, %v1078
    %v1093 = vsub.f32 %v1031, %v1062
    %v1094 = vsub.f32 %v1033, %v1078
    %v1095 = vsub.f32 %v1037, %v1062
    %v1096 = vsub.f32 %v1039, %v1078
    %v1097 = vsub.f32 %v1043, %v1062
    %v1098 = vsub.f32 %v1045, %v1078
    %v1099 = vmul.f32 %v1079, 1.442695
    %v1100 = vpow.pop %v1099
    %v1101 = vmul.f32 %v1080, 1.442695
    %v1102 = vpow.pop %v1101
    %v1103 = vmul.f32 %v1081, 1.442695
    %v1104 = vpow.pop %v1103
    %v1105 = vmul.f32 %v1082, 1.442695
    %v1106 = vpow.pop %v1105
    %v1107 = vmul.f32 %v1083, 1.442695
    %v1108 = vpow.pop %v1107
    %v1109 = vmul.f32 %v1084, 1.442695
    %v1110 = vpow.pop %v1109
    %v1111 = vmul.f32 %v1085, 1.442695
    %v1112 = vpow.pop %v1111
    %v1113 = vmul.f32 %v1086, 1.442695
    %v1114 = vpow.pop %v1113
    %v1115 = vmul.f32 %v1087, 1.442695
    %v1116 = vpow.pop %v1115
    %v1117 = vmul.f32 %v1088, 1.442695
    %v1118 = vpow.pop %v1117
    %v1119 = vmul.f32 %v1089, 1.442695
    %v1120 = vpow.pop %v1119
    %v1121 = vmul.f32 %v1090, 1.442695
    %v1122 = vpow.pop %v1121
    %v1123 = vmul.f32 %v1091, 1.442695
    %v1124 = vpow.pop %v1123
    %v1125 = vmul.f32 %v1092, 1.442695
    %v1126 = vpow.pop %v1125
    %v1127 = vmul.f32 %v1093, 1.442695
    %v1128 = vpow.pop %v1127
    %v1129 = vmul.f32 %v1094, 1.442695
    %v1130 = vpow.pop %v1129
    %v1131 = vmul.f32 %v1095, 1.442695
    %v1132 = vpow.pop %v1131
    %v1133 = vmul.f32 %v1096, 1.442695
    %v1134 = vpow.pop %v1133
    %v1135 = vmul.f32 %v1097, 1.442695
    %v1136 = vpow.pop %v1135
    %v1137 = vmul.f32 %v1098, 1.442695
    %v1138 = vpow.pop %v1137
    %v1139 = vadd.f32 %v1100, %v1104
    %v1140 = vadd.f32 %v1139, %v1108
    %v1141 = vadd.f32 %v1140, %v1112
    %v1142 = vadd.f32 %v1141, %v1116
    %v1143 = vadd.f32 %v1142, %v1120
    %v1144 = vadd.f32 %v1143, %v1124
    %v1145 = vadd.f32 %v1144, %v1128
    %v1146 = vadd.f32 %v1145, %v1132
    %v1147 = vsel %vm225, %v1136, 0.0
    %v1148 = vadd.f32 %v1146, %v1147
    %v1149 = vrot.slane %v1148, 4
    %v1150 = vadd.f32 %v1148, %v1149
    %v1151 = vrot.slane %v1150, 2
    %v1152 = vadd.f32 %v1150, %v1151
    %v1153 = vrot.slane %v1152, 1
    %v1154 = vadd.f32 %v1152, %v1153
    %v1155 = vadd.f32 %v1102, %v1106
    %v1156 = vadd.f32 %v1155, %v1110
    %v1157 = vadd.f32 %v1156, %v1114
    %v1158 = vadd.f32 %v1157, %v1118
    %v1159 = vadd.f32 %v1158, %v1122
    %v1160 = vadd.f32 %v1159, %v1126
    %v1161 = vadd.f32 %v1160, %v1130
    %v1162 = vadd.f32 %v1161, %v1134
    %v1163 = vsel %vm225, %v1138, 0.0
    %v1164 = vadd.f32 %v1162, %v1163
    %v1165 = vrot.slane %v1164, 4
    %v1166 = vadd.f32 %v1164, %v1165
    %v1167 = vrot.slane %v1166, 2
    %v1168 = vadd.f32 %v1166, %v1167
    %v1169 = vrot.slane %v1168, 1
    %v1170 = vadd.f32 %v1168, %v1169
    %v1171 = vrcp.pop %v1154
    %v1172 = vrcp.pop %v1170
    %v1173 = vmul.f32 %v1100, %v1171
    %v1174 = vmul.f32 %v1102, %v1172
    %v1175 = vmul.f32 %v1104, %v1171
    %v1176 = vmul.f32 %v1106, %v1172
    %v1177 = vmul.f32 %v1108, %v1171
    %v1178 = vmul.f32 %v1110, %v1172
    %v1179 = vmul.f32 %v1112, %v1171
    %v1180 = vmul.f32 %v1114, %v1172
    %v1181 = vmul.f32 %v1116, %v1171
    %v1182 = vmul.f32 %v1118, %v1172
    %v1183 = vmul.f32 %v1120, %v1171
    %v1184 = vmul.f32 %v1122, %v1172
    %v1185 = vmul.f32 %v1124, %v1171
    %v1186 = vmul.f32 %v1126, %v1172
    %v1187 = vmul.f32 %v1128, %v1171
    %v1188 = vmul.f32 %v1130, %v1172
    %v1189 = vmul.f32 %v1132, %v1171
    %v1190 = vmul.f32 %v1134, %v1172
    %v1191 = vmul.f32 %v1136, %v1171
    %v1192 = vmul.f32 %v1138, %v1172
    %s1193 = scalar_lea.vmem %s2, 8
    %v1194 = vld [vmem:[%s1193] sm:$0xf]
    %v1195 = vmul.f32 %v1173, %v25
    %v1196 = vmul.f32 %v1174, %v26
    %v1197 = vmul.f32 %v1175, %v27
    %v1198 = vmul.f32 %v1176, %v28
    %v1199 = vmul.f32 %v1177, %v29
    %v1200 = vmul.f32 %v1178, %v30
    %v1201 = vmul.f32 %v1179, %v31
    %v1202 = vmul.f32 %v1180, %v32
    %v1203 = vmul.f32 %v1181, %v33
    %v1204 = vmul.f32 %v1182, %v34
    %v1205 = vmul.f32 %v1183, %v35
    %v1206 = vmul.f32 %v1184, %v36
    %v1207 = vmul.f32 %v1185, %v37
    %v1208 = vmul.f32 %v1186, %v38
    %v1209 = vmul.f32 %v1187, %v39
    %v1210 = vmul.f32 %v1188, %v40
    %v1211 = vmul.f32 %v1189, %v41
    %v1212 = vmul.f32 %v1190, %v42
    %v1213 = vmul.f32 %v1191, %v43
    %v1214 = vmul.f32 %v1192, %v44
    %v1216 = vsel %vm720, %v1194, 0
    %v1219 = vsel %vm225, %v1213, 0
    %v1222 = vsel %vm225, %v1214, 0
    %1224 = vmatprep.subr.mxu0 0.0
    %1225 = vmatpush1.msra.mxu0 0.0
    %1226 = vmatprep.subr.mxu0 0.0
    %1227 = vmatpush1.msra.mxu0 0.0
    %1228 = vmatprep.subr.mxu0 0.0
    %1229 = vmatpush1.msra.mxu0 0.0
    %1230 = vmatprep.subr.mxu0 0.0
    %1231 = vmatpush1.msra.mxu0 0.0
    %1232 = vmatprep.subr.mxu0 0.0
    %1233 = vmatpush1.msra.mxu0 0.0
    %1234 = vmatprep.subr.mxu0 0.0
    %1235 = vmatpush1.msra.mxu0 0.0
    %1236 = vmatprep.subr.mxu0 %v1222
    %1237 = vmatpush1.msra.mxu0 %v1219
    %1238 = vmatprep.subr.mxu0 %v1212
    %1239 = vmatpush1.msra.mxu0 %v1211
    %1240 = vmatprep.subr.mxu0 %v1210
    %1241 = vmatpush1.msra.mxu0 %v1209
    %1242 = vmatprep.subr.mxu0 %v1208
    %1243 = vmatpush1.msra.mxu0 %v1207
    %1244 = vmatprep.subr.mxu0 %v1206
    %1245 = vmatpush1.msra.mxu0 %v1205
    %1246 = vmatprep.subr.mxu0 %v1204
    %1247 = vmatpush1.msra.mxu0 %v1203
    %1248 = vmatprep.subr.mxu0 %v1202
    %1249 = vmatpush1.msra.mxu0 %v1201
    %1250 = vmatprep.subr.mxu0 %v1200
    %1251 = vmatpush1.msra.mxu0 %v1199
    %1252 = vmatprep.subr.mxu0 %v1198
    %1253 = vmatpush1.msra.mxu0 %v1197
    %1254 = vmatprep.subr.mxu0 %v1196
    %1255 = vmatpush1.msra.mxu0 %v1195
    %1256 = vmatprep.subr.mxu0 0.0
    %1257 = vmatpush2.msra.mxu0 0.0
    %1258 = vmatprep.subr.mxu0 0.0
    %1259 = vmatpush2.msra.mxu0 0.0
    %1260 = vmatprep.subr.mxu0 0.0
    %1261 = vmatpush2.msra.mxu0 0.0
    %1262 = vmatprep.subr.mxu0 0.0
    %1263 = vmatpush2.msra.mxu0 0.0
    %1264 = vmatprep.subr.mxu0 0.0
    %1265 = vmatpush2.msra.mxu0 0.0
    %1266 = vmatprep.subr.mxu0 0.0
    %1267 = vmatpush2.msra.mxu0 0.0
    %1268 = vmatprep.subr.mxu0 0.0
    %1269 = vmatpush2.msra.mxu0 0.0
    %1270 = vmatprep.subr.mxu0 0.0
    %1271 = vmatpush2.msra.mxu0 0.0
    %1272 = vmatprep.subr.mxu0 0.0
    %1273 = vmatpush2.msra.mxu0 0.0
    %1274 = vmatprep.subr.mxu0 0.0
    %1275 = vmatpush2.msra.mxu0 0.0
    %1276 = vmatprep.subr.mxu0 0.0
    %1277 = vmatpush2.msra.mxu0 0.0
    %1278 = vmatprep.subr.mxu0 0.0
    %1279 = vmatpush2.msra.mxu0 0.0
    %1280 = vmatprep.subr.mxu0 0.0
    %1281 = vmatpush2.msra.mxu0 0.0
    %1282 = vmatprep.subr.mxu0 0.0
    %1283 = vmatpush2.msra.mxu0 0.0
    %1284 = vmatprep.subr.mxu0 0.0
    %1285 = vmatpush2.msra.mxu0 0.0
    %1286 = vmatprep.subr.mxu0 0.0
    %1287 = vmatpush2.msra.mxu0 0.0
    %1288 = vmatprep.mubr.f32.mxu0 0.0
    %1289 = vmatmul.mubr.f32.gmra.mxu0 %v1216
    %v1290 = vpop.f32.mrf.mxu0
    %v1291 = vadd.f32 0.0, %v1290
    %v1292 = vpop.f32.mrf.mxu0
    %v1293 = vadd.f32 0.0, %v1292
    %1294 = vdwg.mxu0
    %v1295 = vadd.f32 %v877, %v1291
    %v1296 = vadd.f32 %v879, %v1293
    %s1297 = scalar_lea.vmem %s1, 240
    %v1298 = vld [vmem:[%s1297] sm:$0xff]
    %v1299 = vld [vmem:[%s1297 + $0x8] sm:$0xff]
    %v1300 = vld [vmem:[%s1297 + $0x10] sm:$0xff]
    %v1301 = vld [vmem:[%s1297 + $0x18] sm:$0xff]
    %v1302 = vld [vmem:[%s1297 + $0x20] sm:$0xff]
    %v1303 = vld [vmem:[%s1297 + $0x28] sm:$0xff]
    %v1304 = vld [vmem:[%s1297 + $0x30] sm:$0xff]
    %v1305 = vld [vmem:[%s1297 + $0x38] sm:$0xff]
    %v1306 = vld [vmem:[%s1297 + $0x40] sm:$0xff]
    %v1307 = vld [vmem:[%s1297 + $0x48] sm:$0x1f]
    %v1309 = vsel %vm57, %v1298, 0
    %v1312 = vsel %vm57, %v1299, 0
    %v1315 = vsel %vm57, %v1300, 0
    %v1318 = vsel %vm57, %v1301, 0
    %v1321 = vsel %vm57, %v1302, 0
    %v1324 = vsel %vm57, %v1303, 0
    %v1327 = vsel %vm57, %v1304, 0
    %v1330 = vsel %vm57, %v1305, 0
    %v1333 = vsel %vm57, %v1306, 0
    %v1336 = vsel %vm57, %v1307, 0
    %1338 = vmatprep.subr.mxu0 0.0
    %1339 = vmatpush1.msra.mxu0 0.0
    %1340 = vmatprep.subr.mxu0 0.0
    %1341 = vmatpush1.msra.mxu0 0.0
    %1342 = vmatprep.subr.mxu0 0.0
    %1343 = vmatpush1.msra.mxu0 0.0
    %1344 = vmatprep.subr.mxu0 0.0
    %1345 = vmatpush1.msra.mxu0 0.0
    %1346 = vmatprep.subr.mxu0 0.0
    %1347 = vmatpush1.msra.mxu0 0.0
    %1348 = vmatprep.subr.mxu0 0.0
    %1349 = vmatpush1.msra.mxu0 0.0
    %1350 = vmatprep.subr.mxu0 0.0
    %1351 = vmatpush1.msra.mxu0 0.0
    %1352 = vmatprep.subr.mxu0 0.0
    %1353 = vmatpush1.msra.mxu0 0.0
    %1354 = vmatprep.subr.mxu0 0.0
    %1355 = vmatpush1.msra.mxu0 0.0
    %1356 = vmatprep.subr.mxu0 0.0
    %1357 = vmatpush1.msra.mxu0 0.0
    %1358 = vmatprep.subr.mxu0 0.0
    %1359 = vmatpush1.msra.mxu0 0.0
    %1360 = vmatprep.subr.mxu0 0.0
    %1361 = vmatpush1.msra.mxu0 0.0
    %1362 = vmatprep.subr.mxu0 0.0
    %1363 = vmatpush1.msra.mxu0 0.0
    %1364 = vmatprep.subr.mxu0 0.0
    %1365 = vmatpush1.msra.mxu0 0.0
    %1366 = vmatprep.subr.mxu0 0.0
    %1367 = vmatpush1.msra.mxu0 0.0
    %1368 = vmatprep.subr.mxu0 %v91
    %1369 = vmatpush1.msra.mxu0 %v89
    %1370 = vmatprep.subr.mxu0 0.0
    %1371 = vmatpush2.msra.mxu0 0.0
    %1372 = vmatprep.subr.mxu0 0.0
    %1373 = vmatpush2.msra.mxu0 0.0
    %1374 = vmatprep.subr.mxu0 0.0
    %1375 = vmatpush2.msra.mxu0 0.0
    %1376 = vmatprep.subr.mxu0 0.0
    %1377 = vmatpush2.msra.mxu0 0.0
    %1378 = vmatprep.subr.mxu0 0.0
    %1379 = vmatpush2.msra.mxu0 0.0
    %1380 = vmatprep.subr.mxu0 0.0
    %1381 = vmatpush2.msra.mxu0 0.0
    %1382 = vmatprep.subr.mxu0 0.0
    %1383 = vmatpush2.msra.mxu0 0.0
    %1384 = vmatprep.subr.mxu0 0.0
    %1385 = vmatpush2.msra.mxu0 0.0
    %1386 = vmatprep.subr.mxu0 0.0
    %1387 = vmatpush2.msra.mxu0 0.0
    %1388 = vmatprep.subr.mxu0 0.0
    %1389 = vmatpush2.msra.mxu0 0.0
    %1390 = vmatprep.subr.mxu0 0.0
    %1391 = vmatpush2.msra.mxu0 0.0
    %1392 = vmatprep.subr.mxu0 0.0
    %1393 = vmatpush2.msra.mxu0 0.0
    %1394 = vmatprep.subr.mxu0 0.0
    %1395 = vmatpush2.msra.mxu0 0.0
    %1396 = vmatprep.subr.mxu0 0.0
    %1397 = vmatpush2.msra.mxu0 0.0
    %1398 = vmatprep.subr.mxu0 0.0
    %1399 = vmatpush2.msra.mxu0 0.0
    %1400 = vmatprep.subr.mxu0 0.0
    %1401 = vmatpush2.msra.mxu0 0.0
    %1402 = vmatprep.mubr.f32.mxu0 0.0
    %1403 = vmatmul.mubr.f32.gmra.mxu0 %v1309
    %v1404 = vpop.f32.mrf.mxu0
    %v1405 = vadd.f32 0.0, %v1404
    %v1406 = vpop.f32.mrf.mxu0
    %v1407 = vadd.f32 0.0, %v1406
    %1408 = vmatprep.mubr.f32.mxu0 0.0
    %1409 = vmatmul.mubr.f32.gmra.mxu0 %v1312
    %v1410 = vpop.f32.mrf.mxu0
    %v1411 = vadd.f32 0.0, %v1410
    %v1412 = vpop.f32.mrf.mxu0
    %v1413 = vadd.f32 0.0, %v1412
    %1414 = vmatprep.mubr.f32.mxu0 0.0
    %1415 = vmatmul.mubr.f32.gmra.mxu0 %v1315
    %v1416 = vpop.f32.mrf.mxu0
    %v1417 = vadd.f32 0.0, %v1416
    %v1418 = vpop.f32.mrf.mxu0
    %v1419 = vadd.f32 0.0, %v1418
    %1420 = vmatprep.mubr.f32.mxu0 0.0
    %1421 = vmatmul.mubr.f32.gmra.mxu0 %v1318
    %v1422 = vpop.f32.mrf.mxu0
    %v1423 = vadd.f32 0.0, %v1422
    %v1424 = vpop.f32.mrf.mxu0
    %v1425 = vadd.f32 0.0, %v1424
    %1426 = vmatprep.mubr.f32.mxu0 0.0
    %1427 = vmatmul.mubr.f32.gmra.mxu0 %v1321
    %v1428 = vpop.f32.mrf.mxu0
    %v1429 = vadd.f32 0.0, %v1428
    %v1430 = vpop.f32.mrf.mxu0
    %v1431 = vadd.f32 0.0, %v1430
    %1432 = vmatprep.mubr.f32.mxu0 0.0
    %1433 = vmatmul.mubr.f32.gmra.mxu0 %v1324
    %v1434 = vpop.f32.mrf.mxu0
    %v1435 = vadd.f32 0.0, %v1434
    %v1436 = vpop.f32.mrf.mxu0
    %v1437 = vadd.f32 0.0, %v1436
    %1438 = vmatprep.mubr.f32.mxu0 0.0
    %1439 = vmatmul.mubr.f32.gmra.mxu0 %v1327
    %v1440 = vpop.f32.mrf.mxu0
    %v1441 = vadd.f32 0.0, %v1440
    %v1442 = vpop.f32.mrf.mxu0
    %v1443 = vadd.f32 0.0, %v1442
    %1444 = vmatprep.mubr.f32.mxu0 0.0
    %1445 = vmatmul.mubr.f32.gmra.mxu0 %v1330
    %v1446 = vpop.f32.mrf.mxu0
    %v1447 = vadd.f32 0.0, %v1446
    %v1448 = vpop.f32.mrf.mxu0
    %v1449 = vadd.f32 0.0, %v1448
    %1450 = vmatprep.mubr.f32.mxu0 0.0
    %1451 = vmatmul.mubr.f32.gmra.mxu0 %v1333
    %v1452 = vpop.f32.mrf.mxu0
    %v1453 = vadd.f32 0.0, %v1452
    %v1454 = vpop.f32.mrf.mxu0
    %v1455 = vadd.f32 0.0, %v1454
    %1456 = vmatprep.mubr.f32.mxu0 0.0
    %1457 = vmatmul.mubr.f32.gmra.mxu0 %v1336
    %v1458 = vpop.f32.mrf.mxu0
    %v1459 = vadd.f32 0.0, %v1458
    %v1460 = vpop.f32.mrf.mxu0
    %v1461 = vadd.f32 0.0, %v1460
    %1462 = vdwg.mxu0
    %v1463 = vmax.f32 %v1405, %v1417
    %v1464 = vmax.f32 %v1411, %v1423
    %v1465 = vmax.f32 %v1463, %v1429
    %v1466 = vmax.f32 %v1464, %v1435
    %v1467 = vmax.f32 %v1465, %v1441
    %v1468 = vmax.f32 %v1466, %v1447
    %v1469 = vmax.f32 %v1467, %v1453
    %v1470 = vsel %vm225, %v1459, -inf
    %v1471 = vmax.f32 %v1468, %v1470
    %v1472 = vmax.f32 %v1469, %v1471
    %v1473 = vrot.slane %v1472, 4
    %v1474 = vmax.f32 %v1472, %v1473
    %v1475 = vrot.slane %v1474, 2
    %v1476 = vmax.f32 %v1474, %v1475
    %v1477 = vrot.slane %v1476, 1
    %v1478 = vmax.f32 %v1476, %v1477
    %v1479 = vmax.f32 %v1407, %v1419
    %v1480 = vmax.f32 %v1413, %v1425
    %v1481 = vmax.f32 %v1479, %v1431
    %v1482 = vmax.f32 %v1480, %v1437
    %v1483 = vmax.f32 %v1481, %v1443
    %v1484 = vmax.f32 %v1482, %v1449
    %v1485 = vmax.f32 %v1483, %v1455
    %v1486 = vsel %vm225, %v1461, -inf
    %v1487 = vmax.f32 %v1484, %v1486
    %v1488 = vmax.f32 %v1485, %v1487
    %v1489 = vrot.slane %v1488, 4
    %v1490 = vmax.f32 %v1488, %v1489
    %v1491 = vrot.slane %v1490, 2
    %v1492 = vmax.f32 %v1490, %v1491
    %v1493 = vrot.slane %v1492, 1
    %v1494 = vmax.f32 %v1492, %v1493
    %v1495 = vsub.f32 %v1405, %v1478
    %v1496 = vsub.f32 %v1407, %v1494
    %v1497 = vsub.f32 %v1411, %v1478
    %v1498 = vsub.f32 %v1413, %v1494
    %v1499 = vsub.f32 %v1417, %v1478
    %v1500 = vsub.f32 %v1419, %v1494
    %v1501 = vsub.f32 %v1423, %v1478
    %v1502 = vsub.f32 %v1425, %v1494
    %v1503 = vsub.f32 %v1429, %v1478
    %v1504 = vsub.f32 %v1431, %v1494
    %v1505 = vsub.f32 %v1435, %v1478
    %v1506 = vsub.f32 %v1437, %v1494
    %v1507 = vsub.f32 %v1441, %v1478
    %v1508 = vsub.f32 %v1443, %v1494
    %v1509 = vsub.f32 %v1447, %v1478
    %v1510 = vsub.f32 %v1449, %v1494
    %v1511 = vsub.f32 %v1453, %v1478
    %v1512 = vsub.f32 %v1455, %v1494
    %v1513 = vsub.f32 %v1459, %v1478
    %v1514 = vsub.f32 %v1461, %v1494
    %v1515 = vmul.f32 %v1495, 1.442695
    %v1516 = vpow.pop %v1515
    %v1517 = vmul.f32 %v1496, 1.442695
    %v1518 = vpow.pop %v1517
    %v1519 = vmul.f32 %v1497, 1.442695
    %v1520 = vpow.pop %v1519
    %v1521 = vmul.f32 %v1498, 1.442695
    %v1522 = vpow.pop %v1521
    %v1523 = vmul.f32 %v1499, 1.442695
    %v1524 = vpow.pop %v1523
    %v1525 = vmul.f32 %v1500, 1.442695
    %v1526 = vpow.pop %v1525
    %v1527 = vmul.f32 %v1501, 1.442695
    %v1528 = vpow.pop %v1527
    %v1529 = vmul.f32 %v1502, 1.442695
    %v1530 = vpow.pop %v1529
    %v1531 = vmul.f32 %v1503, 1.442695
    %v1532 = vpow.pop %v1531
    %v1533 = vmul.f32 %v1504, 1.442695
    %v1534 = vpow.pop %v1533
    %v1535 = vmul.f32 %v1505, 1.442695
    %v1536 = vpow.pop %v1535
    %v1537 = vmul.f32 %v1506, 1.442695
    %v1538 = vpow.pop %v1537
    %v1539 = vmul.f32 %v1507, 1.442695
    %v1540 = vpow.pop %v1539
    %v1541 = vmul.f32 %v1508, 1.442695
    %v1542 = vpow.pop %v1541
    %v1543 = vmul.f32 %v1509, 1.442695
    %v1544 = vpow.pop %v1543
    %v1545 = vmul.f32 %v1510, 1.442695
    %v1546 = vpow.pop %v1545
    %v1547 = vmul.f32 %v1511, 1.442695
    %v1548 = vpow.pop %v1547
    %v1549 = vmul.f32 %v1512, 1.442695
    %v1550 = vpow.pop %v1549
    %v1551 = vmul.f32 %v1513, 1.442695
    %v1552 = vpow.pop %v1551
    %v1553 = vmul.f32 %v1514, 1.442695
    %v1554 = vpow.pop %v1553
    %v1555 = vadd.f32 %v1516, %v1520
    %v1556 = vadd.f32 %v1555, %v1524
    %v1557 = vadd.f32 %v1556, %v1528
    %v1558 = vadd.f32 %v1557, %v1532
    %v1559 = vadd.f32 %v1558, %v1536
    %v1560 = vadd.f32 %v1559, %v1540
    %v1561 = vadd.f32 %v1560, %v1544
    %v1562 = vadd.f32 %v1561, %v1548
    %v1563 = vsel %vm225, %v1552, 0.0
    %v1564 = vadd.f32 %v1562, %v1563
    %v1565 = vrot.slane %v1564, 4
    %v1566 = vadd.f32 %v1564, %v1565
    %v1567 = vrot.slane %v1566, 2
    %v1568 = vadd.f32 %v1566, %v1567
    %v1569 = vrot.slane %v1568, 1
    %v1570 = vadd.f32 %v1568, %v1569
    %v1571 = vadd.f32 %v1518, %v1522
    %v1572 = vadd.f32 %v1571, %v1526
    %v1573 = vadd.f32 %v1572, %v1530
    %v1574 = vadd.f32 %v1573, %v1534
    %v1575 = vadd.f32 %v1574, %v1538
    %v1576 = vadd.f32 %v1575, %v1542
    %v1577 = vadd.f32 %v1576, %v1546
    %v1578 = vadd.f32 %v1577, %v1550
    %v1579 = vsel %vm225, %v1554, 0.0
    %v1580 = vadd.f32 %v1578, %v1579
    %v1581 = vrot.slane %v1580, 4
    %v1582 = vadd.f32 %v1580, %v1581
    %v1583 = vrot.slane %v1582, 2
    %v1584 = vadd.f32 %v1582, %v1583
    %v1585 = vrot.slane %v1584, 1
    %v1586 = vadd.f32 %v1584, %v1585
    %v1587 = vrcp.pop %v1570
    %v1588 = vrcp.pop %v1586
    %v1589 = vmul.f32 %v1516, %v1587
    %v1590 = vmul.f32 %v1518, %v1588
    %v1591 = vmul.f32 %v1520, %v1587
    %v1592 = vmul.f32 %v1522, %v1588
    %v1593 = vmul.f32 %v1524, %v1587
    %v1594 = vmul.f32 %v1526, %v1588
    %v1595 = vmul.f32 %v1528, %v1587
    %v1596 = vmul.f32 %v1530, %v1588
    %v1597 = vmul.f32 %v1532, %v1587
    %v1598 = vmul.f32 %v1534, %v1588
    %v1599 = vmul.f32 %v1536, %v1587
    %v1600 = vmul.f32 %v1538, %v1588
    %v1601 = vmul.f32 %v1540, %v1587
    %v1602 = vmul.f32 %v1542, %v1588
    %v1603 = vmul.f32 %v1544, %v1587
    %v1604 = vmul.f32 %v1546, %v1588
    %v1605 = vmul.f32 %v1548, %v1587
    %v1606 = vmul.f32 %v1550, %v1588
    %v1607 = vmul.f32 %v1552, %v1587
    %v1608 = vmul.f32 %v1554, %v1588
    %s1609 = scalar_lea.vmem %s2, 12
    %v1610 = vld [vmem:[%s1609] sm:$0xf]
    %v1611 = vmul.f32 %v1589, %v25
    %v1612 = vmul.f32 %v1590, %v26
    %v1613 = vmul.f32 %v1591, %v27
    %v1614 = vmul.f32 %v1592, %v28
    %v1615 = vmul.f32 %v1593, %v29
    %v1616 = vmul.f32 %v1594, %v30
    %v1617 = vmul.f32 %v1595, %v31
    %v1618 = vmul.f32 %v1596, %v32
    %v1619 = vmul.f32 %v1597, %v33
    %v1620 = vmul.f32 %v1598, %v34
    %v1621 = vmul.f32 %v1599, %v35
    %v1622 = vmul.f32 %v1600, %v36
    %v1623 = vmul.f32 %v1601, %v37
    %v1624 = vmul.f32 %v1602, %v38
    %v1625 = vmul.f32 %v1603, %v39
    %v1626 = vmul.f32 %v1604, %v40
    %v1627 = vmul.f32 %v1605, %v41
    %v1628 = vmul.f32 %v1606, %v42
    %v1629 = vmul.f32 %v1607, %v43
    %v1630 = vmul.f32 %v1608, %v44
    %v1632 = vsel %vm720, %v1610, 0
    %v1635 = vsel %vm225, %v1629, 0
    %v1638 = vsel %vm225, %v1630, 0
    %1640 = vmatprep.subr.mxu0 0.0
    %1641 = vmatpush1.msra.mxu0 0.0
    %1642 = vmatprep.subr.mxu0 0.0
    %1643 = vmatpush1.msra.mxu0 0.0
    %1644 = vmatprep.subr.mxu0 0.0
    %1645 = vmatpush1.msra.mxu0 0.0
    %1646 = vmatprep.subr.mxu0 0.0
    %1647 = vmatpush1.msra.mxu0 0.0
    %1648 = vmatprep.subr.mxu0 0.0
    %1649 = vmatpush1.msra.mxu0 0.0
    %1650 = vmatprep.subr.mxu0 0.0
    %1651 = vmatpush1.msra.mxu0 0.0
    %1652 = vmatprep.subr.mxu0 %v1638
    %1653 = vmatpush1.msra.mxu0 %v1635
    %1654 = vmatprep.subr.mxu0 %v1628
    %1655 = vmatpush1.msra.mxu0 %v1627
    %1656 = vmatprep.subr.mxu0 %v1626
    %1657 = vmatpush1.msra.mxu0 %v1625
    %1658 = vmatprep.subr.mxu0 %v1624
    %1659 = vmatpush1.msra.mxu0 %v1623
    %1660 = vmatprep.subr.mxu0 %v1622
    %1661 = vmatpush1.msra.mxu0 %v1621
    %1662 = vmatprep.subr.mxu0 %v1620
    %1663 = vmatpush1.msra.mxu0 %v1619
    %1664 = vmatprep.subr.mxu0 %v1618
    %1665 = vmatpush1.msra.mxu0 %v1617
    %1666 = vmatprep.subr.mxu0 %v1616
    %1667 = vmatpush1.msra.mxu0 %v1615
    %1668 = vmatprep.subr.mxu0 %v1614
    %1669 = vmatpush1.msra.mxu0 %v1613
    %1670 = vmatprep.subr.mxu0 %v1612
    %1671 = vmatpush1.msra.mxu0 %v1611
    %1672 = vmatprep.subr.mxu0 0.0
    %1673 = vmatpush2.msra.mxu0 0.0
    %1674 = vmatprep.subr.mxu0 0.0
    %1675 = vmatpush2.msra.mxu0 0.0
    %1676 = vmatprep.subr.mxu0 0.0
    %1677 = vmatpush2.msra.mxu0 0.0
    %1678 = vmatprep.subr.mxu0 0.0
    %1679 = vmatpush2.msra.mxu0 0.0
    %1680 = vmatprep.subr.mxu0 0.0
    %1681 = vmatpush2.msra.mxu0 0.0
    %1682 = vmatprep.subr.mxu0 0.0
    %1683 = vmatpush2.msra.mxu0 0.0
    %1684 = vmatprep.subr.mxu0 0.0
    %1685 = vmatpush2.msra.mxu0 0.0
    %1686 = vmatprep.subr.mxu0 0.0
    %1687 = vmatpush2.msra.mxu0 0.0
    %1688 = vmatprep.subr.mxu0 0.0
    %1689 = vmatpush2.msra.mxu0 0.0
    %1690 = vmatprep.subr.mxu0 0.0
    %1691 = vmatpush2.msra.mxu0 0.0
    %1692 = vmatprep.subr.mxu0 0.0
    %1693 = vmatpush2.msra.mxu0 0.0
    %1694 = vmatprep.subr.mxu0 0.0
    %1695 = vmatpush2.msra.mxu0 0.0
    %1696 = vmatprep.subr.mxu0 0.0
    %1697 = vmatpush2.msra.mxu0 0.0
    %1698 = vmatprep.subr.mxu0 0.0
    %1699 = vmatpush2.msra.mxu0 0.0
    %1700 = vmatprep.subr.mxu0 0.0
    %1701 = vmatpush2.msra.mxu0 0.0
    %1702 = vmatprep.subr.mxu0 0.0
    %1703 = vmatpush2.msra.mxu0 0.0
    %1704 = vmatprep.mubr.f32.mxu0 0.0
    %1705 = vmatmul.mubr.f32.gmra.mxu0 %v1632
    %v1706 = vpop.f32.mrf.mxu0
    %v1707 = vadd.f32 0.0, %v1706
    %v1708 = vpop.f32.mrf.mxu0
    %v1709 = vadd.f32 0.0, %v1708
    %1710 = vdwg.mxu0
    %v1711 = vadd.f32 %v1295, %v1707
    %v1712 = vadd.f32 %v1296, %v1709
    %v1713 = vmul.f32 %v1711, 0.02
    %v1714 = vmul.f32 %v1712, 0.02
    %v1717 = vcombine.low %v1713, %v1714
    %v1719 = vsub.f32 %v24, %v1717
  $region22: #{prompt2img_forward.1} parent=0 // loop_footer
    %s23 = sadd.s32 1, %s19
  $region23: #{prompt2img_forward.1} parent=0 // loop_footer_branch
    %18 = sbr.rel target = $region19
  $region24: #{prompt2img_forward.1} parent=0 // loop_exit
    _
  %1720 = vst [vmem:[%s4] sm:$0xff] %v24
  // Predicated region
  $region25: #{prompt2img_forward.1} parent=0 // pred_check
    _
  $region26: #{prompt2img_forward.1} parent=0 // pred_check_branch
    %1722 = sbr.rel (0) target = $region28
  $region27: #{prompt2img_forward.1} parent=0 // pred_region
    _
  $region28: #{prompt2img_forward.1} parent=0 // pred_fallthru
    _
  // Predicated region
  $region29: #{prompt2img_forward.1} parent=0 // pred_check
    _
  $region30: #{prompt2img_forward.1} parent=0 // pred_check_branch
    %1724 = sbr.rel (0) target = $region32
  $region31: #{prompt2img_forward.1} parent=0 // pred_region
    _
  $region32: #{prompt2img_forward.1} parent=0 // pred_fallthru
    _

</llo_original>
